<compile_context>
chip_gen: v6e
topology: v6e:2x2x1
jax: 0.10.0
libtpu: 0.0.40
codegen_flags: <defaults>
</compile_context>

<pallas_src>
import functools

import jax
import jax.numpy as jnp
from jax.experimental import pallas as pl
from jax.experimental.pallas import tpu as pltpu


def _round_up(x, m):
    return ((x + m - 1) // m) * m


# ----------------------------------------------------------------------------
# Fused Pallas kernel: tap-GEMM conv -> bias -> ReLU -> mask -> max-pool -> FC
# ----------------------------------------------------------------------------
def _textcnn_fused_kernel(x_ref, w_ref, cb_ref, mask_ref, fcw_ref, fcb_ref,
                          out_ref, *, TB, TP, D, CP, K_MAX):
    # x_ref   : (TB, TW, D)    bf16  raw activation window (batch tile)
    # w_ref   : (K_MAX, D, CP) f32   packed conv weights (zero taps for k < k_max)
    # cb_ref  : (1, CP)        f32   packed conv bias
    # mask_ref: (TP, CP)       f32   1.0 where (time, channel) is a valid position
    # fcw_ref : (CP, LP)       f32   FC weight (zero rows / cols for padding)
    # fcb_ref : (1, LP)        f32   FC bias (zero-padded)
    # out_ref : (TB, LP)       f32   lane-dense logits tile
    x = x_ref[...].astype(jnp.float32)                       # one upcast in VMEM

    # Conv as K_MAX tap GEMMs: acc[b, t, :] += x[b, t + dk, :] @ w[dk]
    acc = jnp.dot(x[:, 0:TP, :].reshape(TB * TP, D), w_ref[0],
                  preferred_element_type=jnp.float32)        # (TB*TP, CP) f32
    for dk in range(1, K_MAX):                               # static unrolled taps
        acc = acc + jnp.dot(x[:, dk:dk + TP, :].reshape(TB * TP, D), w_ref[dk],
                            preferred_element_type=jnp.float32)

    # One vectorized epilogue: bias + ReLU + validity mask, then time max-pool.
    act = jnp.maximum(acc.reshape(TB, TP, CP) + cb_ref[...], 0.0) * mask_ref[...]
    pooled = jnp.max(act, axis=1)                            # (TB, CP)

    # Dropout(p=0.5) is identity in eval/inference mode.
    # TODO(synk): training-mode dropout masking not implemented (inference semantics).
    out_ref[...] = (jnp.dot(pooled, fcw_ref[...],
                            preferred_element_type=jnp.float32) + fcb_ref[...])


# ----------------------------------------------------------------------------
# One-time parameter packing (x-independent; hoisted off the hot path)
# ----------------------------------------------------------------------------
def pack_params(params, kernel_list, vec_num, vec_dim):
    k_min, k_max = min(kernel_list), max(kernel_list)
    C = params["convs"][0][0].shape[2]                       # kernel_num
    C_total = C * len(kernel_list)
    L = params["fc_w_t"].shape[1]
    V, D = vec_num, vec_dim

    T_out = V - k_min + 1                                    # longest conv output
    TP = _round_up(T_out, 16)                                # bf16-friendly sublanes
    TW = _round_up(TP + k_max - 1, 8)                        # activation window rows
    CP = _round_up(C_total, 128)                             # lane-dense channels
    LP = _round_up(L, 128)                                   # lane-dense logits

    # Pack all branch weights / biases along one lane-dense channel axis;
    # taps >= k_i carry zero weights -> exact no-ops.
    w_packed = jnp.zeros((k_max, D, CP), jnp.float32)
    cb = jnp.zeros((1, CP), jnp.float32)
    for i, (k, (w, b)) in enumerate(zip(kernel_list, params["convs"])):
        w_packed = w_packed.at[:k, :, i * C:(i + 1) * C].set(w)  # w: (k, D, C)
        cb = cb.at[:, i * C:(i + 1) * C].set(b)

    # Validity mask: branch i yields V - k_i + 1 time steps; tail taps, time
    # padding and channel padding all pool to exactly 0 (ReLU output >= 0).
    t_idx = jnp.arange(TP, dtype=jnp.float32)[:, None]       # (TP, 1)
    t_limit = jnp.zeros((CP,), jnp.float32)
    for i, k in enumerate(kernel_list):
        t_limit = t_limit.at[i * C:(i + 1) * C].set(float(V - k + 1))
    mask = (t_idx < t_limit[None, :]).astype(jnp.float32)    # (TP, CP)

    fcw = jnp.zeros((CP, LP), jnp.float32).at[:C_total, :L].set(params["fc_w_t"])
    fcb = jnp.zeros((1, LP), jnp.float32).at[:, :L].set(params["fc_b"])

    return {
        "w": w_packed, "cb": cb, "mask": mask, "fcw": fcw, "fcb": fcb,
        "cfg": dict(V=V, D=D, K_MAX=k_max, TP=TP, TW=TW, CP=CP, LP=LP, L=L),
    }


# ----------------------------------------------------------------------------
# Forward: pad/cast activations, single fused pallas_call, slice valid output
# ----------------------------------------------------------------------------
def textcnn_forward(x, packed):
    """x: (B, 1, vec_num, vec_dim) float32 (PyTorch NCHW, chanel_num == 1)."""
    cfg = packed["cfg"]
    V, D, K_MAX = cfg["V"], cfg["D"], cfg["K_MAX"]
    TP, TW, CP, LP, L = cfg["TP"], cfg["TW"], cfg["CP"], cfg["LP"], cfg["L"]

    B = x.shape[0]
    xs = x[:, 0, :, :].astype(jnp.float32)                   # (B, V, D)

    # Batch tile: multiple of 16, >= 4 grid steps for large B (v7x dual-TC),
    # capped at 128 rows so the f32 intermediates stay small in VMEM.
    TB = min(128, max(16, _round_up(pl.cdiv(B, 4), 16)))
    B_pad = _round_up(B, TB)

    # Pad batch + time with zeros (finite -> safe under mask) and DMA as bf16.
    xs = jnp.pad(xs, ((0, B_pad - B), (0, TW - V), (0, 0))).astype(jnp.bfloat16)

    kern = functools.partial(_textcnn_fused_kernel,
                             TB=TB, TP=TP, D=D, CP=CP, K_MAX=K_MAX)
    out = pl.pallas_call(
        kern,
        out_shape=jax.ShapeDtypeStruct((B_pad, LP), jnp.float32),
        grid=(B_pad // TB,),
        in_specs=[
            pl.BlockSpec((TB, TW, D), lambda i: (i, 0, 0)),
            pl.BlockSpec((K_MAX, D, CP), lambda i: (0, 0, 0)),
            pl.BlockSpec((1, CP), lambda i: (0, 0)),
            pl.BlockSpec((TP, CP), lambda i: (0, 0)),
            pl.BlockSpec((CP, LP), lambda i: (0, 0)),
            pl.BlockSpec((1, LP), lambda i: (0, 0)),
        ],
        out_specs=pl.BlockSpec((TB, LP), lambda i: (i, 0)),
        compiler_params=pltpu.CompilerParams(
            dimension_semantics=("parallel",),
            vmem_limit_bytes=32 * 1024 * 1024),
    )(xs, packed["w"], packed["cb"], packed["mask"], packed["fcw"], packed["fcb"])

    return out[:B, :L]


# ----------------------------------------------------------------------------
# Deterministic parameter init (mimics PyTorch default uniform fan-in init)
# ----------------------------------------------------------------------------
def init_params(key, vec_dim, kernel_num, label_num, kernel_list):
    params = {"convs": []}
    for k in kernel_list:
        key, k1, k2 = jax.random.split(key, 3)
        fan_in = 1 * k * vec_dim
        bound = 1.0 / float(fan_in) ** 0.5
        # PyTorch layout (C, 1, k, D) -> kernel layout (k, D, C)
        w_torch = jax.random.uniform(k1, (kernel_num, 1, k, vec_dim),
                                     jnp.float32, -bound, bound)
        w = jnp.transpose(w_torch[:, 0, :, :], (1, 2, 0))     # (k, D, C)
        b = jax.random.uniform(k2, (1, kernel_num), jnp.float32, -bound, bound)
        params["convs"].append((w, b))

    feat_dim = kernel_num * len(kernel_list)
    key, k1, k2 = jax.random.split(key, 3)
    bound = 1.0 / float(feat_dim) ** 0.5
    fc_w = jax.random.uniform(k1, (label_num, feat_dim), jnp.float32, -bound, bound)
    fc_b = jax.random.uniform(k2, (1, label_num), jnp.float32, -bound, bound)
    params["fc_w_t"] = fc_w.T                                 # (feat_dim, label_num)
    params["fc_b"] = fc_b
    return params


# ----------------------------------------------------------------------------
# Plain-JAX f32 reference for a correctness check
# ----------------------------------------------------------------------------
def reference_forward(x, params, kernel_list):
    xs = x[:, 0, :, :]
    pooled = []
    for k, (w, b) in zip(kernel_list, params["convs"]):       # w: (k, D, C)
        T = xs.shape[1] - k + 1
        s = jnp.zeros((xs.shape[0], T, w.shape[2]), jnp.float32)
        for dk in range(k):
            s = s + jnp.einsum("btd,dc->btc", xs[:, dk:dk + T, :], w[dk])
        s = jnp.maximum(s + b[0][None, None, :], 0.0)
        pooled.append(jnp.max(s, axis=1))
    feat = jnp.concatenate(pooled, axis=1)
    return feat @ params["fc_w_t"] + params["fc_b"]


if __name__ == "__main__":
    # Small, module-consistent shapes.
    B, vec_num, vec_dim = 2, 16, 32
    kernel_num, label_num = 8, 4
    kernel_list = (2, 3, 4)

    key = jax.random.PRNGKey(0)
    key, xkey = jax.random.split(key)
    x = jax.random.normal(xkey, (B, 1, vec_num, vec_dim), jnp.float32)

    params = init_params(key, vec_dim, kernel_num, label_num, kernel_list)
    packed = pack_params(params, kernel_list, vec_num, vec_dim)   # one-time prep

    out = textcnn_forward(x, packed)
    out = jax.block_until_ready(out)

    ref = reference_forward(x, params, kernel_list)
    assert out.shape == (B, label_num)
    assert jnp.allclose(out, ref, rtol=2e-2, atol=2e-2), float(
        jnp.max(jnp.abs(out - ref)))

    print("KERNEL_OK")
</pallas_src>

<mosaic_0001>
module attributes {stable_mosaic.version = 11 : i64} {
  func.func @_textcnn_fused_kernel(%arg0: i32, %arg1: memref<16x24x32xbf16, #tpu.memory_space<vmem>>, %arg2: memref<4x32x128xf32, #tpu.memory_space<vmem>>, %arg3: memref<1x128xf32, #tpu.memory_space<vmem>>, %arg4: memref<16x128xf32, #tpu.memory_space<vmem>>, %arg5: memref<128x128xf32, #tpu.memory_space<vmem>>, %arg6: memref<1x128xf32, #tpu.memory_space<vmem>>, %arg7: memref<16x128xf32, #tpu.memory_space<vmem>>) attributes {dimension_semantics = [#tpu.dimension_semantics<parallel>], iteration_bounds = array<i64: 1>, scalar_prefetch = 0 : i64, scratch_operands = 0 : i64, tpu.core_type = #tpu.core_type<tc>, window_params = [{transform_indices = @transform_0, window_bounds = array<i64: 16, 24, 32>}, {pipeline_mode = #tpu.pipeline_mode<synchronous>, transform_indices = @transform_1, window_bounds = array<i64: 4, 32, 128>}, {pipeline_mode = #tpu.pipeline_mode<synchronous>, transform_indices = @transform_2, window_bounds = array<i64: 1, 128>}, {pipeline_mode = #tpu.pipeline_mode<synchronous>, transform_indices = @transform_3, window_bounds = array<i64: 16, 128>}, {pipeline_mode = #tpu.pipeline_mode<synchronous>, transform_indices = @transform_4, window_bounds = array<i64: 128, 128>}, {pipeline_mode = #tpu.pipeline_mode<synchronous>, transform_indices = @transform_5, window_bounds = array<i64: 1, 128>}, {transform_indices = @transform_6, window_bounds = array<i64: 16, 128>}]} {
    %c0 = arith.constant 0 : index
    %c0_0 = arith.constant 0 : index
    %c0_1 = arith.constant 0 : index
    %0 = vector.load %arg1[%c0, %c0_0, %c0_1] : memref<16x24x32xbf16, #tpu.memory_space<vmem>>, vector<16x24x32xbf16>
    %1 = arith.extf %0 : vector<16x24x32xbf16> to vector<16x24x32xf32>
    %2 = vector.extract_strided_slice %1 {offsets = [0, 0, 0], sizes = [16, 16, 32], strides = [1, 1, 1]} : vector<16x24x32xf32> to vector<16x16x32xf32>
    %3 = vector.shape_cast %2 : vector<16x16x32xf32> to vector<256x32xf32>
    %c0_2 = arith.constant 0 : index
    %c0_3 = arith.constant 0 : index
    %c0_4 = arith.constant 0 : index
    %4 = vector.load %arg2[%c0_2, %c0_3, %c0_4] : memref<4x32x128xf32, #tpu.memory_space<vmem>>, vector<1x32x128xf32>
    %5 = vector.shape_cast %4 : vector<1x32x128xf32> to vector<32x128xf32>
    %cst = arith.constant dense<0.000000e+00> : vector<256x128xf32>
    %6 = tpu.matmul %3, %5, %cst {dimension_numbers = #tpu.dot_dimension_numbers<[1], [0], [0], [1], [0, 0, 1, 1], [], []>} : vector<256x32xf32>, vector<32x128xf32>, vector<256x128xf32> -> vector<256x128xf32>
    %7 = vector.extract_strided_slice %1 {offsets = [0, 1, 0], sizes = [16, 16, 32], strides = [1, 1, 1]} : vector<16x24x32xf32> to vector<16x16x32xf32>
    %8 = vector.shape_cast %7 : vector<16x16x32xf32> to vector<256x32xf32>
    %c1 = arith.constant 1 : index
    %c0_5 = arith.constant 0 : index
    %c0_6 = arith.constant 0 : index
    %9 = vector.load %arg2[%c1, %c0_5, %c0_6] : memref<4x32x128xf32, #tpu.memory_space<vmem>>, vector<1x32x128xf32>
    %10 = vector.shape_cast %9 : vector<1x32x128xf32> to vector<32x128xf32>
    %cst_7 = arith.constant dense<0.000000e+00> : vector<256x128xf32>
    %11 = tpu.matmul %8, %10, %cst_7 {dimension_numbers = #tpu.dot_dimension_numbers<[1], [0], [0], [1], [0, 0, 1, 1], [], []>} : vector<256x32xf32>, vector<32x128xf32>, vector<256x128xf32> -> vector<256x128xf32>
    %12 = arith.addf %6, %11 : vector<256x128xf32>
    %13 = vector.extract_strided_slice %1 {offsets = [0, 2, 0], sizes = [16, 16, 32], strides = [1, 1, 1]} : vector<16x24x32xf32> to vector<16x16x32xf32>
    %14 = vector.shape_cast %13 : vector<16x16x32xf32> to vector<256x32xf32>
    %c2 = arith.constant 2 : index
    %c0_8 = arith.constant 0 : index
    %c0_9 = arith.constant 0 : index
    %15 = vector.load %arg2[%c2, %c0_8, %c0_9] : memref<4x32x128xf32, #tpu.memory_space<vmem>>, vector<1x32x128xf32>
    %16 = vector.shape_cast %15 : vector<1x32x128xf32> to vector<32x128xf32>
    %cst_10 = arith.constant dense<0.000000e+00> : vector<256x128xf32>
    %17 = tpu.matmul %14, %16, %cst_10 {dimension_numbers = #tpu.dot_dimension_numbers<[1], [0], [0], [1], [0, 0, 1, 1], [], []>} : vector<256x32xf32>, vector<32x128xf32>, vector<256x128xf32> -> vector<256x128xf32>
    %18 = arith.addf %12, %17 : vector<256x128xf32>
    %19 = vector.extract_strided_slice %1 {offsets = [0, 3, 0], sizes = [16, 16, 32], strides = [1, 1, 1]} : vector<16x24x32xf32> to vector<16x16x32xf32>
    %20 = vector.shape_cast %19 : vector<16x16x32xf32> to vector<256x32xf32>
    %c3 = arith.constant 3 : index
    %c0_11 = arith.constant 0 : index
    %c0_12 = arith.constant 0 : index
    %21 = vector.load %arg2[%c3, %c0_11, %c0_12] : memref<4x32x128xf32, #tpu.memory_space<vmem>>, vector<1x32x128xf32>
    %22 = vector.shape_cast %21 : vector<1x32x128xf32> to vector<32x128xf32>
    %cst_13 = arith.constant dense<0.000000e+00> : vector<256x128xf32>
    %23 = tpu.matmul %20, %22, %cst_13 {dimension_numbers = #tpu.dot_dimension_numbers<[1], [0], [0], [1], [0, 0, 1, 1], [], []>} : vector<256x32xf32>, vector<32x128xf32>, vector<256x128xf32> -> vector<256x128xf32>
    %24 = arith.addf %18, %23 : vector<256x128xf32>
    %25 = vector.shape_cast %24 : vector<256x128xf32> to vector<16x16x128xf32>
    %c0_14 = arith.constant 0 : index
    %c0_15 = arith.constant 0 : index
    %26 = vector.load %arg3[%c0_14, %c0_15] : memref<1x128xf32, #tpu.memory_space<vmem>>, vector<1x128xf32>
    %27 = vector.shape_cast %26 : vector<1x128xf32> to vector<1x1x128xf32>
    %28 = vector.broadcast %27 : vector<1x1x128xf32> to vector<16x16x128xf32>
    %29 = arith.addf %25, %28 : vector<16x16x128xf32>
    %cst_16 = arith.constant 0.000000e+00 : f32
    %30 = vector.broadcast %cst_16 : f32 to vector<16x16x128xf32>
    %31 = arith.maximumf %29, %30 : vector<16x16x128xf32>
    %c0_17 = arith.constant 0 : index
    %c0_18 = arith.constant 0 : index
    %32 = vector.load %arg4[%c0_17, %c0_18] : memref<16x128xf32, #tpu.memory_space<vmem>>, vector<16x128xf32>
    %33 = vector.shape_cast %32 : vector<16x128xf32> to vector<1x16x128xf32>
    %34 = vector.broadcast %33 : vector<1x16x128xf32> to vector<16x16x128xf32>
    %35 = arith.mulf %31, %34 : vector<16x16x128xf32>
    %cst_19 = arith.constant dense<0xFF800000> : vector<16x128xf32>
    %36 = vector.multi_reduction <maximumf>, %35, %cst_19 [1] : vector<16x16x128xf32> to vector<16x128xf32>
    %c0_20 = arith.constant 0 : index
    %c0_21 = arith.constant 0 : index
    %37 = vector.load %arg5[%c0_20, %c0_21] : memref<128x128xf32, #tpu.memory_space<vmem>>, vector<128x128xf32>
    %cst_22 = arith.constant dense<0.000000e+00> : vector<16x128xf32>
    %38 = tpu.matmul %36, %37, %cst_22 {dimension_numbers = #tpu.dot_dimension_numbers<[1], [0], [0], [1], [0, 0, 1, 1], [], []>} : vector<16x128xf32>, vector<128x128xf32>, vector<16x128xf32> -> vector<16x128xf32>
    %c0_23 = arith.constant 0 : index
    %c0_24 = arith.constant 0 : index
    %39 = vector.load %arg6[%c0_23, %c0_24] : memref<1x128xf32, #tpu.memory_space<vmem>>, vector<1x128xf32>
    %40 = vector.broadcast %39 : vector<1x128xf32> to vector<16x128xf32>
    %41 = arith.addf %38, %40 : vector<16x128xf32>
    %c0_25 = arith.constant 0 : index
    %c0_26 = arith.constant 0 : index
    %42 = vector.load %arg7[%c0_25, %c0_26] : memref<16x128xf32, #tpu.memory_space<vmem>>, vector<16x128xf32>
    tpu.vector_store %arg7[%c0_25, %c0_26], %41 {strides = array<i32>} : memref<16x128xf32, #tpu.memory_space<vmem>>, vector<16x128xf32>,
    return
  }
  func.func @transform_0(%arg0: i32) -> (i32, i32, i32) {
    %c0_i32 = arith.constant 0 : i32
    %c0_i32_0 = arith.constant 0 : i32
    %c0_i32_1 = arith.constant 0 : i32
    return %arg0, %c0_i32, %c0_i32_0 : i32, i32, i32
  }
  func.func @transform_1(%arg0: i32) -> (i32, i32, i32) {
    %c0_i32 = arith.constant 0 : i32
    %c0_i32_0 = arith.constant 0 : i32
    %c0_i32_1 = arith.constant 0 : i32
    %c0_i32_2 = arith.constant 0 : i32
    return %c0_i32, %c0_i32_0, %c0_i32_1 : i32, i32, i32
  }
  func.func @transform_2(%arg0: i32) -> (i32, i32) {
    %c0_i32 = arith.constant 0 : i32
    %c0_i32_0 = arith.constant 0 : i32
    %c0_i32_1 = arith.constant 0 : i32
    return %c0_i32, %c0_i32_0 : i32, i32
  }
  func.func @transform_3(%arg0: i32) -> (i32, i32) {
    %c0_i32 = arith.constant 0 : i32
    %c0_i32_0 = arith.constant 0 : i32
    %c0_i32_1 = arith.constant 0 : i32
    return %c0_i32, %c0_i32_0 : i32, i32
  }
  func.func @transform_4(%arg0: i32) -> (i32, i32) {
    %c0_i32 = arith.constant 0 : i32
    %c0_i32_0 = arith.constant 0 : i32
    %c0_i32_1 = arith.constant 0 : i32
    return %c0_i32, %c0_i32_0 : i32, i32
  }
  func.func @transform_5(%arg0: i32) -> (i32, i32) {
    %c0_i32 = arith.constant 0 : i32
    %c0_i32_0 = arith.constant 0 : i32
    %c0_i32_1 = arith.constant 0 : i32
    return %c0_i32, %c0_i32_0 : i32, i32
  }
  func.func @transform_6(%arg0: i32) -> (i32, i32) {
    %c0_i32 = arith.constant 0 : i32
    %c0_i32_0 = arith.constant 0 : i32
    return %arg0, %c0_i32 : i32, i32
  }
}

</mosaic_0001>

<llo_original>
// kernel: tpu_custom_call.1
$region0: #{tpu_custom_call.1}
  #allocation0 [shape = 'u32[]', space=smem, size = 0x4, offset = 0x4, fixed_abs, tag = 'smem constant byte address 0x4 - core index']
  #allocation1 [shape = 'u32[144,128]{1,0:T(1,128)}', space=vmem, size = 0x12000, scoped, tag = 'internal scratch']
  %s0 = inlined_call_operand.hbm [shape: bf16[16,24,32], index: 0, kind: input, shape index: {}]
  %s1 = inlined_call_operand.hbm [shape: f32[4,32,128], index: 1, kind: input, shape index: {}]
  %s2 = inlined_call_operand.vmem [shape: f32[1,128], index: 2, kind: input, shape index: {}]
  %s3 = inlined_call_operand.hbm [shape: f32[16,128], index: 3, kind: input, shape index: {}]
  %s4 = inlined_call_operand.hbm [shape: f32[128,128], index: 4, kind: input, shape index: {}]
  %s5 = inlined_call_operand.vmem [shape: f32[1,128], index: 5, kind: input, shape index: {}]
  %s6 = inlined_call_operand.hbm [shape: f32[16,128], index: 6, kind: output, shape index: {}]
  %s7 = sld [smem:[#allocation0]]
  $region50: #{tpu_custom_call.1} parent=0
    _
  %s9 = ssub.s32 1, %s7
  %s10 = scalar_select 0, %s9, %s7
  $region1: #{tpu_custom_call.1} parent=0
    #allocation2 [shape = 'u8[98304]{0}', space=vmem, size = 0x18000, scoped, tag = 'input window, operand 0, single buffered']
    #allocation3 [shape = 's32[1]{0}', space=sflag, size = 0x4, scoped, tag = 'scoped memory for tpu_custom_call.1']
    #allocation4 [shape = 's32[1]{0}', space=sflag, size = 0x4, scoped, tag = 'scoped memory for tpu_custom_call.1']
    #allocation5 [shape = 'u8[65536]{0}', space=vmem, size = 0x10000, scoped, tag = 'input window, operand 1, single buffered']
    #allocation6 [shape = 's32[1]{0}', space=sflag, size = 0x4, scoped, tag = 'scoped memory for tpu_custom_call.1']
    #allocation7 [shape = 'u8[8192]{0}', space=vmem, size = 0x2000, scoped, tag = 'input window, operand 3, single buffered']
    #allocation8 [shape = 'u8[65536]{0}', space=vmem, size = 0x10000, scoped, tag = 'input window, operand 4, single buffered']
    #allocation9 [shape = 's32[1]{0}', space=sflag, size = 0x4, scoped, tag = 'scoped memory for tpu_custom_call.1']
    #allocation10 [shape = 'u8[8192]{0}', space=vmem, size = 0x2000, scoped, tag = 'output window, operand 0, single buffered']
    %11 = vsyncpa [#allocation3], 0
    %12 = vsyncpa [#allocation6], 0
    %13 = vsyncpa [#allocation9], 0
    %14 = vsyncpa [#allocation4], 0
    // Predicated region
    $region2: #{tpu_custom_call.1} parent=1 // pred_check
      _
    $region3: #{tpu_custom_call.1} parent=1 // pred_check_branch
      %16 = sbr.rel (0) target = $region5
    $region4: #{tpu_custom_call.1} parent=1 // pred_region
      %s18 = ssub.s32 3072, 3072
      %19 = vsyncadd [#allocation3], %s18
      %s20 = sshll.u32 [#allocation2], 4
      %s21 = int_to_ptr.vmem [resolvable:$true] %s20
      %26 = dma.hbm_to_vmem [thread:$0]  %s0, 3072, %s21, [#allocation3], 64, 64, 4
    $region5: #{tpu_custom_call.1} parent=1 // pred_fallthru
      _
    // Predicated region
    $region6: #{tpu_custom_call.1} parent=1 // pred_check
      _
    $region7: #{tpu_custom_call.1} parent=1 // pred_check_branch
      %28 = sbr.rel (0) target = $region9
    $region8: #{tpu_custom_call.1} parent=1 // pred_region
      %s30 = ssub.s32 2048, 2048
      %31 = vsyncadd [#allocation6], %s30
      %s32 = sshll.u32 [#allocation5], 4
      %s33 = int_to_ptr.vmem [resolvable:$true] %s32
      %38 = dma.hbm_to_vmem [thread:$0]  %s1, 2048, %s33, [#allocation6], 128, 128, 8
    $region9: #{tpu_custom_call.1} parent=1 // pred_fallthru
      _
    // Predicated region
    $region10: #{tpu_custom_call.1} parent=1 // pred_check
      _
    $region11: #{tpu_custom_call.1} parent=1 // pred_check_branch
      %40 = sbr.rel (0) target = $region13
    $region12: #{tpu_custom_call.1} parent=1 // pred_region
      _
    $region13: #{tpu_custom_call.1} parent=1 // pred_fallthru
      _
    // Predicated region
    $region14: #{tpu_custom_call.1} parent=1 // pred_check
      _
    $region15: #{tpu_custom_call.1} parent=1 // pred_check_branch
      %42 = sbr.rel (0) target = $region17
    $region16: #{tpu_custom_call.1} parent=1 // pred_region
      %s44 = ssub.s32 256, 256
      %45 = vsyncadd [#allocation6], %s44
      %s46 = sshll.u32 [#allocation7], 4
      %s47 = int_to_ptr.vmem [resolvable:$true] %s46
      %52 = dma.hbm_to_vmem [thread:$0]  %s3, 256, %s47, [#allocation6], 128, 128, 8
    $region17: #{tpu_custom_call.1} parent=1 // pred_fallthru
      _
    // Predicated region
    $region18: #{tpu_custom_call.1} parent=1 // pred_check
      _
    $region19: #{tpu_custom_call.1} parent=1 // pred_check_branch
      %54 = sbr.rel (0) target = $region21
    $region20: #{tpu_custom_call.1} parent=1 // pred_region
      %s56 = ssub.s32 2048, 2048
      %57 = vsyncadd [#allocation9], %s56
      %s58 = sshll.u32 [#allocation8], 4
      %s59 = int_to_ptr.vmem [resolvable:$true] %s58
      %64 = dma.hbm_to_vmem [thread:$0]  %s4, 2048, %s59, [#allocation9], 128, 128, 8
    $region21: #{tpu_custom_call.1} parent=1 // pred_fallthru
      _
    // Predicated region
    $region22: #{tpu_custom_call.1} parent=1 // pred_check
      _
    $region23: #{tpu_custom_call.1} parent=1 // pred_check_branch
      %66 = sbr.rel (0) target = $region25
    $region24: #{tpu_custom_call.1} parent=1 // pred_region
      _
    $region25: #{tpu_custom_call.1} parent=1 // pred_fallthru
      _
    // Predicated region
    $region26: #{tpu_custom_call.1} parent=1 // pred_check
      _
    $region27: #{tpu_custom_call.1} parent=1 // pred_check_branch
      %68 = sbr.rel (0) target = $region29
    $region28: #{tpu_custom_call.1} parent=1 // pred_region
      %69 = dma.done [#allocation3], 3072
    $region29: #{tpu_custom_call.1} parent=1 // pred_fallthru
      _
    // Predicated region
    $region30: #{tpu_custom_call.1} parent=1 // pred_check
      _
    $region31: #{tpu_custom_call.1} parent=1 // pred_check_branch
      %71 = sbr.rel (0) target = $region33
    $region32: #{tpu_custom_call.1} parent=1 // pred_region
      %72 = dma.done [#allocation6], 2048
    $region33: #{tpu_custom_call.1} parent=1 // pred_fallthru
      _
    // Predicated region
    $region34: #{tpu_custom_call.1} parent=1 // pred_check
      _
    $region35: #{tpu_custom_call.1} parent=1 // pred_check_branch
      %74 = sbr.rel (0) target = $region37
    $region36: #{tpu_custom_call.1} parent=1 // pred_region
      %75 = dma.done [#allocation6], 256
    $region37: #{tpu_custom_call.1} parent=1 // pred_fallthru
      _
    // Predicated region
    $region38: #{tpu_custom_call.1} parent=1 // pred_check
      _
    $region39: #{tpu_custom_call.1} parent=1 // pred_check_branch
      %77 = sbr.rel (0) target = $region41
    $region40: #{tpu_custom_call.1} parent=1 // pred_region
      %78 = dma.done [#allocation9], 2048
    $region41: #{tpu_custom_call.1} parent=1 // pred_fallthru
      _
    %v79 = vld [vmem:[#allocation2] sm:$0xf]
    %v80 = vld [vmem:[#allocation2 + $0x4] sm:$0xf]
    %v81 = vld [vmem:[#allocation2 + $0x8] sm:$0xf]
    %v82 = vld [vmem:[#allocation2 + $0xc] sm:$0xf]
    %v83 = vld [vmem:[#allocation2 + $0x10] sm:$0xf]
    %v84 = vld [vmem:[#allocation2 + $0x14] sm:$0xf]
    %v85 = vld [vmem:[#allocation2 + $0x18] sm:$0xf]
    %v86 = vld [vmem:[#allocation2 + $0x1c] sm:$0xf]
    %v87 = vld [vmem:[#allocation2 + $0x20] sm:$0xf]
    %v88 = vld [vmem:[#allocation2 + $0x24] sm:$0xf]
    %v89 = vld [vmem:[#allocation2 + $0x28] sm:$0xf]
    %v90 = vld [vmem:[#allocation2 + $0x2c] sm:$0xf]
    %v91 = vld [vmem:[#allocation2 + $0x30] sm:$0xf]
    %v92 = vld [vmem:[#allocation2 + $0x34] sm:$0xf]
    %v93 = vld [vmem:[#allocation2 + $0x38] sm:$0xf]
    %v94 = vld [vmem:[#allocation2 + $0x3c] sm:$0xf]
    %v95 = vld [vmem:[#allocation2 + $0x40] sm:$0xf]
    %v96 = vld [vmem:[#allocation2 + $0x44] sm:$0xf]
    %v97 = vld [vmem:[#allocation2 + $0x48] sm:$0xf]
    %v98 = vld [vmem:[#allocation2 + $0x4c] sm:$0xf]
    %v99 = vld [vmem:[#allocation2 + $0x50] sm:$0xf]
    %v100 = vld [vmem:[#allocation2 + $0x54] sm:$0xf]
    %v101 = vld [vmem:[#allocation2 + $0x58] sm:$0xf]
    %v102 = vld [vmem:[#allocation2 + $0x5c] sm:$0xf]
    %v103 = vld [vmem:[#allocation2 + $0x60] sm:$0xf]
    %v104 = vld [vmem:[#allocation2 + $0x64] sm:$0xf]
    %v105 = vld [vmem:[#allocation2 + $0x68] sm:$0xf]
    %v106 = vld [vmem:[#allocation2 + $0x6c] sm:$0xf]
    %v107 = vld [vmem:[#allocation2 + $0x70] sm:$0xf]
    %v108 = vld [vmem:[#allocation2 + $0x74] sm:$0xf]
    %v109 = vld [vmem:[#allocation2 + $0x78] sm:$0xf]
    %v110 = vld [vmem:[#allocation2 + $0x7c] sm:$0xf]
    %v111 = vld [vmem:[#allocation2 + $0x80] sm:$0xf]
    %v112 = vld [vmem:[#allocation2 + $0x84] sm:$0xf]
    %v113 = vld [vmem:[#allocation2 + $0x88] sm:$0xf]
    %v114 = vld [vmem:[#allocation2 + $0x8c] sm:$0xf]
    %v115 = vld [vmem:[#allocation2 + $0x90] sm:$0xf]
    %v116 = vld [vmem:[#allocation2 + $0x94] sm:$0xf]
    %v117 = vld [vmem:[#allocation2 + $0x98] sm:$0xf]
    %v118 = vld [vmem:[#allocation2 + $0x9c] sm:$0xf]
    %v119 = vld [vmem:[#allocation2 + $0xa0] sm:$0xf]
    %v120 = vld [vmem:[#allocation2 + $0xa4] sm:$0xf]
    %v121 = vld [vmem:[#allocation2 + $0xa8] sm:$0xf]
    %v122 = vld [vmem:[#allocation2 + $0xac] sm:$0xf]
    %v123 = vld [vmem:[#allocation2 + $0xb0] sm:$0xf]
    %v124 = vld [vmem:[#allocation2 + $0xb4] sm:$0xf]
    %v125 = vld [vmem:[#allocation2 + $0xb8] sm:$0xf]
    %v126 = vld [vmem:[#allocation2 + $0xbc] sm:$0xf]
    %v127 = vunpack.c.l.bf16 %v79
    %v128 = vunpack.c.l.bf16 %v80
    %v129 = vunpack.c.l.bf16 %v81
    %v130 = vunpack.c.l.bf16 %v82
    %v131 = vunpack.c.l.bf16 %v83
    %v132 = vunpack.c.l.bf16 %v84
    %v133 = vunpack.c.l.bf16 %v85
    %v134 = vunpack.c.l.bf16 %v86
    %v135 = vunpack.c.l.bf16 %v87
    %v136 = vunpack.c.l.bf16 %v88
    %v137 = vunpack.c.l.bf16 %v89
    %v138 = vunpack.c.l.bf16 %v90
    %v139 = vunpack.c.l.bf16 %v91
    %v140 = vunpack.c.l.bf16 %v92
    %v141 = vunpack.c.l.bf16 %v93
    %v142 = vunpack.c.l.bf16 %v94
    %v143 = vunpack.c.l.bf16 %v95
    %v144 = vunpack.c.l.bf16 %v96
    %v145 = vunpack.c.l.bf16 %v97
    %v146 = vunpack.c.l.bf16 %v98
    %v147 = vunpack.c.l.bf16 %v99
    %v148 = vunpack.c.l.bf16 %v100
    %v149 = vunpack.c.l.bf16 %v101
    %v150 = vunpack.c.l.bf16 %v102
    %v151 = vunpack.c.l.bf16 %v103
    %v152 = vunpack.c.l.bf16 %v104
    %v153 = vunpack.c.l.bf16 %v105
    %v154 = vunpack.c.l.bf16 %v106
    %v155 = vunpack.c.l.bf16 %v107
    %v156 = vunpack.c.l.bf16 %v108
    %v157 = vunpack.c.l.bf16 %v109
    %v158 = vunpack.c.l.bf16 %v110
    %v159 = vunpack.c.l.bf16 %v111
    %v160 = vunpack.c.l.bf16 %v112
    %v161 = vunpack.c.l.bf16 %v113
    %v162 = vunpack.c.l.bf16 %v114
    %v163 = vunpack.c.l.bf16 %v115
    %v164 = vunpack.c.l.bf16 %v116
    %v165 = vunpack.c.l.bf16 %v117
    %v166 = vunpack.c.l.bf16 %v118
    %v167 = vunpack.c.l.bf16 %v119
    %v168 = vunpack.c.l.bf16 %v120
    %v169 = vunpack.c.l.bf16 %v121
    %v170 = vunpack.c.l.bf16 %v122
    %v171 = vunpack.c.l.bf16 %v123
    %v172 = vunpack.c.l.bf16 %v124
    %v173 = vunpack.c.l.bf16 %v125
    %v174 = vunpack.c.l.bf16 %v126
    %v175 = vld [vmem:[#allocation5] sm:$0xff]
    %v176 = vld [vmem:[#allocation5 + $0x8] sm:$0xff]
    %v177 = vld [vmem:[#allocation5 + $0x10] sm:$0xff]
    %v178 = vld [vmem:[#allocation5 + $0x18] sm:$0xff]
    %vm227 = vcmask 1046528
    %v228 = vrot.slane %v127, 1
    %v229 = vrot.slane %v128, 1
    %v230 = vsel %vm227, %v228, %v229
    %v231 = vrot.slane %v129, 1
    %v232 = vsel %vm227, %v229, %v231
    %v233 = vrot.slane %v130, 1
    %v234 = vrot.slane %v131, 1
    %v235 = vsel %vm227, %v233, %v234
    %v236 = vrot.slane %v132, 1
    %v237 = vsel %vm227, %v234, %v236
    %v238 = vrot.slane %v133, 1
    %v239 = vrot.slane %v134, 1
    %v240 = vsel %vm227, %v238, %v239
    %v241 = vrot.slane %v135, 1
    %v242 = vsel %vm227, %v239, %v241
    %v243 = vrot.slane %v136, 1
    %v244 = vrot.slane %v137, 1
    %v245 = vsel %vm227, %v243, %v244
    %v246 = vrot.slane %v138, 1
    %v247 = vsel %vm227, %v244, %v246
    %v248 = vrot.slane %v139, 1
    %v249 = vrot.slane %v140, 1
    %v250 = vsel %vm227, %v248, %v249
    %v251 = vrot.slane %v141, 1
    %v252 = vsel %vm227, %v249, %v251
    %v253 = vrot.slane %v142, 1
    %v254 = vrot.slane %v143, 1
    %v255 = vsel %vm227, %v253, %v254
    %v256 = vrot.slane %v144, 1
    %v257 = vsel %vm227, %v254, %v256
    %v258 = vrot.slane %v145, 1
    %v259 = vrot.slane %v146, 1
    %v260 = vsel %vm227, %v258, %v259
    %v261 = vrot.slane %v147, 1
    %v262 = vsel %vm227, %v259, %v261
    %v263 = vrot.slane %v148, 1
    %v264 = vrot.slane %v149, 1
    %v265 = vsel %vm227, %v263, %v264
    %v266 = vrot.slane %v150, 1
    %v267 = vsel %vm227, %v264, %v266
    %v268 = vrot.slane %v151, 1
    %v269 = vrot.slane %v152, 1
    %v270 = vsel %vm227, %v268, %v269
    %v271 = vrot.slane %v153, 1
    %v272 = vsel %vm227, %v269, %v271
    %v273 = vrot.slane %v154, 1
    %v274 = vrot.slane %v155, 1
    %v275 = vsel %vm227, %v273, %v274
    %v276 = vrot.slane %v156, 1
    %v277 = vsel %vm227, %v274, %v276
    %v278 = vrot.slane %v157, 1
    %v279 = vrot.slane %v158, 1
    %v280 = vsel %vm227, %v278, %v279
    %v281 = vrot.slane %v159, 1
    %v282 = vsel %vm227, %v279, %v281
    %v283 = vrot.slane %v160, 1
    %v284 = vrot.slane %v161, 1
    %v285 = vsel %vm227, %v283, %v284
    %v286 = vrot.slane %v162, 1
    %v287 = vsel %vm227, %v284, %v286
    %v288 = vrot.slane %v163, 1
    %v289 = vrot.slane %v164, 1
    %v290 = vsel %vm227, %v288, %v289
    %v291 = vrot.slane %v165, 1
    %v292 = vsel %vm227, %v289, %v291
    %v293 = vrot.slane %v166, 1
    %v294 = vrot.slane %v167, 1
    %v295 = vsel %vm227, %v293, %v294
    %v296 = vrot.slane %v168, 1
    %v297 = vsel %vm227, %v294, %v296
    %v298 = vrot.slane %v169, 1
    %v299 = vrot.slane %v170, 1
    %v300 = vsel %vm227, %v298, %v299
    %v301 = vrot.slane %v171, 1
    %v302 = vsel %vm227, %v299, %v301
    %v303 = vrot.slane %v172, 1
    %v304 = vrot.slane %v173, 1
    %v305 = vsel %vm227, %v303, %v304
    %v306 = vrot.slane %v174, 1
    %v307 = vsel %vm227, %v304, %v306
    %s308 = scalar_lea.vmem [#allocation5], 32
    %v309 = vld [vmem:[%s308] sm:$0xff]
    %v310 = vld [vmem:[%s308 + $0x8] sm:$0xff]
    %v311 = vld [vmem:[%s308 + $0x10] sm:$0xff]
    %v312 = vld [vmem:[%s308 + $0x18] sm:$0xff]
    %vm313 = vcmask 261120
    %v314 = vsel %vm313, %v230, 0
    %v316 = vsel %vm313, %v232, 0
    %v318 = vsel %vm313, %v235, 0
    %v320 = vsel %vm313, %v237, 0
    %v322 = vsel %vm313, %v240, 0
    %v324 = vsel %vm313, %v242, 0
    %v326 = vsel %vm313, %v245, 0
    %v328 = vsel %vm313, %v247, 0
    %v330 = vsel %vm313, %v250, 0
    %v332 = vsel %vm313, %v252, 0
    %v334 = vsel %vm313, %v255, 0
    %v336 = vsel %vm313, %v257, 0
    %v338 = vsel %vm313, %v260, 0
    %v340 = vsel %vm313, %v262, 0
    %v342 = vsel %vm313, %v265, 0
    %v344 = vsel %vm313, %v267, 0
    %v346 = vsel %vm313, %v270, 0
    %v348 = vsel %vm313, %v272, 0
    %v350 = vsel %vm313, %v275, 0
    %v352 = vsel %vm313, %v277, 0
    %v354 = vsel %vm313, %v280, 0
    %v356 = vsel %vm313, %v282, 0
    %v358 = vsel %vm313, %v285, 0
    %v360 = vsel %vm313, %v287, 0
    %v362 = vsel %vm313, %v290, 0
    %v364 = vsel %vm313, %v292, 0
    %v366 = vsel %vm313, %v295, 0
    %v368 = vsel %vm313, %v297, 0
    %v370 = vsel %vm313, %v300, 0
    %v372 = vsel %vm313, %v302, 0
    %v374 = vsel %vm313, %v305, 0
    %v376 = vsel %vm313, %v307, 0
    %378 = vmatprep.subr.mxu0 0.0
    %379 = vmatpush1.msra.mxu0 0.0
    %380 = vmatprep.subr.mxu0 0.0
    %381 = vmatpush1.msra.mxu0 0.0
    %382 = vmatprep.subr.mxu0 0.0
    %383 = vmatpush1.msra.mxu0 0.0
    %384 = vmatprep.subr.mxu0 0.0
    %385 = vmatpush1.msra.mxu0 0.0
    %386 = vmatprep.subr.mxu0 0.0
    %387 = vmatpush1.msra.mxu0 0.0
    %388 = vmatprep.subr.mxu0 0.0
    %389 = vmatpush1.msra.mxu0 0.0
    %390 = vmatprep.subr.mxu0 0.0
    %391 = vmatpush1.msra.mxu0 0.0
    %392 = vmatprep.subr.mxu0 0.0
    %393 = vmatpush1.msra.mxu0 0.0
    %394 = vmatprep.subr.mxu0 0.0
    %395 = vmatpush1.msra.mxu0 0.0
    %396 = vmatprep.subr.mxu0 0.0
    %397 = vmatpush1.msra.mxu0 0.0
    %398 = vmatprep.subr.mxu0 0.0
    %399 = vmatpush1.msra.mxu0 0.0
    %400 = vmatprep.subr.mxu0 0.0
    %401 = vmatpush1.msra.mxu0 0.0
    %402 = vmatprep.subr.mxu0 0.0
    %403 = vmatpush1.msra.mxu0 %v312
    %404 = vmatprep.subr.mxu0 0.0
    %405 = vmatpush1.msra.mxu0 %v311
    %406 = vmatprep.subr.mxu0 0.0
    %407 = vmatpush1.msra.mxu0 %v310
    %408 = vmatprep.subr.mxu0 0.0
    %409 = vmatpush1.msra.mxu0 %v309
    %410 = vmatprep.subr.mxu0 0.0
    %411 = vmatpush2.msra.mxu0 0.0
    %412 = vmatprep.subr.mxu0 0.0
    %413 = vmatpush2.msra.mxu0 0.0
    %414 = vmatprep.subr.mxu0 0.0
    %415 = vmatpush2.msra.mxu0 0.0
    %416 = vmatprep.subr.mxu0 0.0
    %417 = vmatpush2.msra.mxu0 0.0
    %418 = vmatprep.subr.mxu0 0.0
    %419 = vmatpush2.msra.mxu0 0.0
    %420 = vmatprep.subr.mxu0 0.0
    %421 = vmatpush2.msra.mxu0 0.0
    %422 = vmatprep.subr.mxu0 0.0
    %423 = vmatpush2.msra.mxu0 0.0
    %424 = vmatprep.subr.mxu0 0.0
    %425 = vmatpush2.msra.mxu0 0.0
    %426 = vmatprep.subr.mxu0 0.0
    %427 = vmatpush2.msra.mxu0 0.0
    %428 = vmatprep.subr.mxu0 0.0
    %429 = vmatpush2.msra.mxu0 0.0
    %430 = vmatprep.subr.mxu0 0.0
    %431 = vmatpush2.msra.mxu0 0.0
    %432 = vmatprep.subr.mxu0 0.0
    %433 = vmatpush2.msra.mxu0 0.0
    %434 = vmatprep.subr.mxu0 0.0
    %435 = vmatpush2.msra.mxu0 0.0
    %436 = vmatprep.subr.mxu0 0.0
    %437 = vmatpush2.msra.mxu0 0.0
    %438 = vmatprep.subr.mxu0 0.0
    %439 = vmatpush2.msra.mxu0 0.0
    %440 = vmatprep.subr.mxu0 0.0
    %441 = vmatpush2.msra.mxu0 0.0
    %442 = vmatprep.mubr.f32.mxu0 0.0
    %443 = vmatmul.mubr.f32.gmra.mxu0 %v314
    %v444 = vpop.f32.mrf.mxu0
    %v445 = vadd.f32 0.0, %v444
    %v446 = vpop.f32.mrf.mxu0
    %447 = vmatprep.mubr.f32.mxu0 0.0
    %448 = vmatmul.mubr.f32.gmra.mxu0 %v316
    %v449 = vpop.f32.mrf.mxu0
    %v450 = vadd.f32 0.0, %v449
    %v451 = vpop.f32.mrf.mxu0
    %452 = vmatprep.mubr.f32.mxu0 0.0
    %453 = vmatmul.mubr.f32.gmra.mxu0 %v318
    %v454 = vpop.f32.mrf.mxu0
    %v455 = vadd.f32 0.0, %v454
    %v456 = vpop.f32.mrf.mxu0
    %457 = vmatprep.mubr.f32.mxu0 0.0
    %458 = vmatmul.mubr.f32.gmra.mxu0 %v320
    %v459 = vpop.f32.mrf.mxu0
    %v460 = vadd.f32 0.0, %v459
    %v461 = vpop.f32.mrf.mxu0
    %462 = vmatprep.mubr.f32.mxu0 0.0
    %463 = vmatmul.mubr.f32.gmra.mxu0 %v322
    %v464 = vpop.f32.mrf.mxu0
    %v465 = vadd.f32 0.0, %v464
    %v466 = vpop.f32.mrf.mxu0
    %467 = vmatprep.mubr.f32.mxu0 0.0
    %468 = vmatmul.mubr.f32.gmra.mxu0 %v324
    %v469 = vpop.f32.mrf.mxu0
    %v470 = vadd.f32 0.0, %v469
    %v471 = vpop.f32.mrf.mxu0
    %472 = vmatprep.mubr.f32.mxu0 0.0
    %473 = vmatmul.mubr.f32.gmra.mxu0 %v326
    %v474 = vpop.f32.mrf.mxu0
    %v475 = vadd.f32 0.0, %v474
    %v476 = vpop.f32.mrf.mxu0
    %477 = vmatprep.mubr.f32.mxu0 0.0
    %478 = vmatmul.mubr.f32.gmra.mxu0 %v328
    %v479 = vpop.f32.mrf.mxu0
    %v480 = vadd.f32 0.0, %v479
    %v481 = vpop.f32.mrf.mxu0
    %482 = vmatprep.mubr.f32.mxu0 0.0
    %483 = vmatmul.mubr.f32.gmra.mxu0 %v330
    %v484 = vpop.f32.mrf.mxu0
    %v485 = vadd.f32 0.0, %v484
    %v486 = vpop.f32.mrf.mxu0
    %487 = vmatprep.mubr.f32.mxu0 0.0
    %488 = vmatmul.mubr.f32.gmra.mxu0 %v332
    %v489 = vpop.f32.mrf.mxu0
    %v490 = vadd.f32 0.0, %v489
    %v491 = vpop.f32.mrf.mxu0
    %492 = vmatprep.mubr.f32.mxu0 0.0
    %493 = vmatmul.mubr.f32.gmra.mxu0 %v334
    %v494 = vpop.f32.mrf.mxu0
    %v495 = vadd.f32 0.0, %v494
    %v496 = vpop.f32.mrf.mxu0
    %497 = vmatprep.mubr.f32.mxu0 0.0
    %498 = vmatmul.mubr.f32.gmra.mxu0 %v336
    %v499 = vpop.f32.mrf.mxu0
    %v500 = vadd.f32 0.0, %v499
    %v501 = vpop.f32.mrf.mxu0
    %502 = vmatprep.mubr.f32.mxu0 0.0
    %503 = vmatmul.mubr.f32.gmra.mxu0 %v338
    %v504 = vpop.f32.mrf.mxu0
    %v505 = vadd.f32 0.0, %v504
    %v506 = vpop.f32.mrf.mxu0
    %507 = vmatprep.mubr.f32.mxu0 0.0
    %508 = vmatmul.mubr.f32.gmra.mxu0 %v340
    %v509 = vpop.f32.mrf.mxu0
    %v510 = vadd.f32 0.0, %v509
    %v511 = vpop.f32.mrf.mxu0
    %512 = vmatprep.mubr.f32.mxu0 0.0
    %513 = vmatmul.mubr.f32.gmra.mxu0 %v342
    %v514 = vpop.f32.mrf.mxu0
    %v515 = vadd.f32 0.0, %v514
    %v516 = vpop.f32.mrf.mxu0
    %517 = vmatprep.mubr.f32.mxu0 0.0
    %518 = vmatmul.mubr.f32.gmra.mxu0 %v344
    %v519 = vpop.f32.mrf.mxu0
    %v520 = vadd.f32 0.0, %v519
    %v521 = vpop.f32.mrf.mxu0
    %522 = vmatprep.mubr.f32.mxu0 0.0
    %523 = vmatmul.mubr.f32.gmra.mxu0 %v346
    %v524 = vpop.f32.mrf.mxu0
    %v525 = vadd.f32 0.0, %v524
    %v526 = vpop.f32.mrf.mxu0
    %527 = vmatprep.mubr.f32.mxu0 0.0
    %528 = vmatmul.mubr.f32.gmra.mxu0 %v348
    %v529 = vpop.f32.mrf.mxu0
    %v530 = vadd.f32 0.0, %v529
    %v531 = vpop.f32.mrf.mxu0
    %532 = vmatprep.mubr.f32.mxu0 0.0
    %533 = vmatmul.mubr.f32.gmra.mxu0 %v350
    %v534 = vpop.f32.mrf.mxu0
    %v535 = vadd.f32 0.0, %v534
    %v536 = vpop.f32.mrf.mxu0
    %537 = vmatprep.mubr.f32.mxu0 0.0
    %538 = vmatmul.mubr.f32.gmra.mxu0 %v352
    %v539 = vpop.f32.mrf.mxu0
    %v540 = vadd.f32 0.0, %v539
    %v541 = vpop.f32.mrf.mxu0
    %542 = vmatprep.mubr.f32.mxu0 0.0
    %543 = vmatmul.mubr.f32.gmra.mxu0 %v354
    %v544 = vpop.f32.mrf.mxu0
    %v545 = vadd.f32 0.0, %v544
    %v546 = vpop.f32.mrf.mxu0
    %547 = vmatprep.mubr.f32.mxu0 0.0
    %548 = vmatmul.mubr.f32.gmra.mxu0 %v356
    %v549 = vpop.f32.mrf.mxu0
    %v550 = vadd.f32 0.0, %v549
    %v551 = vpop.f32.mrf.mxu0
    %552 = vmatprep.mubr.f32.mxu0 0.0
    %553 = vmatmul.mubr.f32.gmra.mxu0 %v358
    %v554 = vpop.f32.mrf.mxu0
    %v555 = vadd.f32 0.0, %v554
    %v556 = vpop.f32.mrf.mxu0
    %557 = vmatprep.mubr.f32.mxu0 0.0
    %558 = vmatmul.mubr.f32.gmra.mxu0 %v360
    %v559 = vpop.f32.mrf.mxu0
    %v560 = vadd.f32 0.0, %v559
    %v561 = vpop.f32.mrf.mxu0
    %562 = vmatprep.mubr.f32.mxu0 0.0
    %563 = vmatmul.mubr.f32.gmra.mxu0 %v362
    %v564 = vpop.f32.mrf.mxu0
    %v565 = vadd.f32 0.0, %v564
    %v566 = vpop.f32.mrf.mxu0
    %567 = vmatprep.mubr.f32.mxu0 0.0
    %568 = vmatmul.mubr.f32.gmra.mxu0 %v364
    %v569 = vpop.f32.mrf.mxu0
    %v570 = vadd.f32 0.0, %v569
    %v571 = vpop.f32.mrf.mxu0
    %572 = vmatprep.mubr.f32.mxu0 0.0
    %573 = vmatmul.mubr.f32.gmra.mxu0 %v366
    %v574 = vpop.f32.mrf.mxu0
    %v575 = vadd.f32 0.0, %v574
    %v576 = vpop.f32.mrf.mxu0
    %577 = vmatprep.mubr.f32.mxu0 0.0
    %578 = vmatmul.mubr.f32.gmra.mxu0 %v368
    %v579 = vpop.f32.mrf.mxu0
    %v580 = vadd.f32 0.0, %v579
    %v581 = vpop.f32.mrf.mxu0
    %582 = vmatprep.mubr.f32.mxu0 0.0
    %583 = vmatmul.mubr.f32.gmra.mxu0 %v370
    %v584 = vpop.f32.mrf.mxu0
    %v585 = vadd.f32 0.0, %v584
    %v586 = vpop.f32.mrf.mxu0
    %587 = vmatprep.mubr.f32.mxu0 0.0
    %588 = vmatmul.mubr.f32.gmra.mxu0 %v372
    %v589 = vpop.f32.mrf.mxu0
    %v590 = vadd.f32 0.0, %v589
    %v591 = vpop.f32.mrf.mxu0
    %592 = vmatprep.mubr.f32.mxu0 0.0
    %593 = vmatmul.mubr.f32.gmra.mxu0 %v374
    %v594 = vpop.f32.mrf.mxu0
    %v595 = vadd.f32 0.0, %v594
    %v596 = vpop.f32.mrf.mxu0
    %597 = vmatprep.mubr.f32.mxu0 0.0
    %598 = vmatmul.mubr.f32.gmra.mxu0 %v376
    %v599 = vpop.f32.mrf.mxu0
    %v600 = vadd.f32 0.0, %v599
    %v601 = vpop.f32.mrf.mxu0
    %602 = vdwg.mxu0
    %v603 = vsel %vm313, %v127, 0
    %v605 = vsel %vm313, %v128, 0
    %v607 = vsel %vm313, %v130, 0
    %v609 = vsel %vm313, %v131, 0
    %v611 = vsel %vm313, %v133, 0
    %v613 = vsel %vm313, %v134, 0
    %v615 = vsel %vm313, %v136, 0
    %v617 = vsel %vm313, %v137, 0
    %v619 = vsel %vm313, %v139, 0
    %v621 = vsel %vm313, %v140, 0
    %v623 = vsel %vm313, %v142, 0
    %v625 = vsel %vm313, %v143, 0
    %v627 = vsel %vm313, %v145, 0
    %v629 = vsel %vm313, %v146, 0
    %v631 = vsel %vm313, %v148, 0
    %v633 = vsel %vm313, %v149, 0
    %v635 = vsel %vm313, %v151, 0
    %v637 = vsel %vm313, %v152, 0
    %v639 = vsel %vm313, %v154, 0
    %v641 = vsel %vm313, %v155, 0
    %v643 = vsel %vm313, %v157, 0
    %v645 = vsel %vm313, %v158, 0
    %v647 = vsel %vm313, %v160, 0
    %v649 = vsel %vm313, %v161, 0
    %v651 = vsel %vm313, %v163, 0
    %v653 = vsel %vm313, %v164, 0
    %v655 = vsel %vm313, %v166, 0
    %v657 = vsel %vm313, %v167, 0
    %v659 = vsel %vm313, %v169, 0
    %v661 = vsel %vm313, %v170, 0
    %v663 = vsel %vm313, %v172, 0
    %v665 = vsel %vm313, %v173, 0
    %667 = vmatprep.subr.mxu0 0.0
    %668 = vmatpush1.msra.mxu0 0.0
    %669 = vmatprep.subr.mxu0 0.0
    %670 = vmatpush1.msra.mxu0 0.0
    %671 = vmatprep.subr.mxu0 0.0
    %672 = vmatpush1.msra.mxu0 0.0
    %673 = vmatprep.subr.mxu0 0.0
    %674 = vmatpush1.msra.mxu0 0.0
    %675 = vmatprep.subr.mxu0 0.0
    %676 = vmatpush1.msra.mxu0 0.0
    %677 = vmatprep.subr.mxu0 0.0
    %678 = vmatpush1.msra.mxu0 0.0
    %679 = vmatprep.subr.mxu0 0.0
    %680 = vmatpush1.msra.mxu0 0.0
    %681 = vmatprep.subr.mxu0 0.0
    %682 = vmatpush1.msra.mxu0 0.0
    %683 = vmatprep.subr.mxu0 0.0
    %684 = vmatpush1.msra.mxu0 0.0
    %685 = vmatprep.subr.mxu0 0.0
    %686 = vmatpush1.msra.mxu0 0.0
    %687 = vmatprep.subr.mxu0 0.0
    %688 = vmatpush1.msra.mxu0 0.0
    %689 = vmatprep.subr.mxu0 0.0
    %690 = vmatpush1.msra.mxu0 0.0
    %691 = vmatprep.subr.mxu0 0.0
    %692 = vmatpush1.msra.mxu0 %v178
    %693 = vmatprep.subr.mxu0 0.0
    %694 = vmatpush1.msra.mxu0 %v177
    %695 = vmatprep.subr.mxu0 0.0
    %696 = vmatpush1.msra.mxu0 %v176
    %697 = vmatprep.subr.mxu0 0.0
    %698 = vmatpush1.msra.mxu0 %v175
    %699 = vmatprep.subr.mxu0 0.0
    %700 = vmatpush2.msra.mxu0 0.0
    %701 = vmatprep.subr.mxu0 0.0
    %702 = vmatpush2.msra.mxu0 0.0
    %703 = vmatprep.subr.mxu0 0.0
    %704 = vmatpush2.msra.mxu0 0.0
    %705 = vmatprep.subr.mxu0 0.0
    %706 = vmatpush2.msra.mxu0 0.0
    %707 = vmatprep.subr.mxu0 0.0
    %708 = vmatpush2.msra.mxu0 0.0
    %709 = vmatprep.subr.mxu0 0.0
    %710 = vmatpush2.msra.mxu0 0.0
    %711 = vmatprep.subr.mxu0 0.0
    %712 = vmatpush2.msra.mxu0 0.0
    %713 = vmatprep.subr.mxu0 0.0
    %714 = vmatpush2.msra.mxu0 0.0
    %715 = vmatprep.subr.mxu0 0.0
    %716 = vmatpush2.msra.mxu0 0.0
    %717 = vmatprep.subr.mxu0 0.0
    %718 = vmatpush2.msra.mxu0 0.0
    %719 = vmatprep.subr.mxu0 0.0
    %720 = vmatpush2.msra.mxu0 0.0
    %721 = vmatprep.subr.mxu0 0.0
    %722 = vmatpush2.msra.mxu0 0.0
    %723 = vmatprep.subr.mxu0 0.0
    %724 = vmatpush2.msra.mxu0 0.0
    %725 = vmatprep.subr.mxu0 0.0
    %726 = vmatpush2.msra.mxu0 0.0
    %727 = vmatprep.subr.mxu0 0.0
    %728 = vmatpush2.msra.mxu0 0.0
    %729 = vmatprep.subr.mxu0 0.0
    %730 = vmatpush2.msra.mxu0 0.0
    %731 = vmatprep.mubr.f32.mxu0 0.0
    %732 = vmatmul.mubr.f32.gmra.mxu0 %v603
    %v733 = vpop.f32.mrf.mxu0
    %v734 = vadd.f32 %v445, %v733
    %v735 = vpop.f32.mrf.mxu0
    %736 = vmatprep.mubr.f32.mxu0 0.0
    %737 = vmatmul.mubr.f32.gmra.mxu0 %v605
    %v738 = vpop.f32.mrf.mxu0
    %v739 = vadd.f32 %v450, %v738
    %v740 = vpop.f32.mrf.mxu0
    %741 = vmatprep.mubr.f32.mxu0 0.0
    %742 = vmatmul.mubr.f32.gmra.mxu0 %v607
    %v743 = vpop.f32.mrf.mxu0
    %v744 = vadd.f32 %v455, %v743
    %v745 = vpop.f32.mrf.mxu0
    %746 = vmatprep.mubr.f32.mxu0 0.0
    %747 = vmatmul.mubr.f32.gmra.mxu0 %v609
    %v748 = vpop.f32.mrf.mxu0
    %v749 = vadd.f32 %v460, %v748
    %v750 = vpop.f32.mrf.mxu0
    %751 = vmatprep.mubr.f32.mxu0 0.0
    %752 = vmatmul.mubr.f32.gmra.mxu0 %v611
    %v753 = vpop.f32.mrf.mxu0
    %v754 = vadd.f32 %v465, %v753
    %v755 = vpop.f32.mrf.mxu0
    %756 = vmatprep.mubr.f32.mxu0 0.0
    %757 = vmatmul.mubr.f32.gmra.mxu0 %v613
    %v758 = vpop.f32.mrf.mxu0
    %v759 = vadd.f32 %v470, %v758
    %v760 = vpop.f32.mrf.mxu0
    %761 = vmatprep.mubr.f32.mxu0 0.0
    %762 = vmatmul.mubr.f32.gmra.mxu0 %v615
    %v763 = vpop.f32.mrf.mxu0
    %v764 = vadd.f32 %v475, %v763
    %v765 = vpop.f32.mrf.mxu0
    %766 = vmatprep.mubr.f32.mxu0 0.0
    %767 = vmatmul.mubr.f32.gmra.mxu0 %v617
    %v768 = vpop.f32.mrf.mxu0
    %v769 = vadd.f32 %v480, %v768
    %v770 = vpop.f32.mrf.mxu0
    %771 = vmatprep.mubr.f32.mxu0 0.0
    %772 = vmatmul.mubr.f32.gmra.mxu0 %v619
    %v773 = vpop.f32.mrf.mxu0
    %v774 = vadd.f32 %v485, %v773
    %v775 = vpop.f32.mrf.mxu0
    %776 = vmatprep.mubr.f32.mxu0 0.0
    %777 = vmatmul.mubr.f32.gmra.mxu0 %v621
    %v778 = vpop.f32.mrf.mxu0
    %v779 = vadd.f32 %v490, %v778
    %v780 = vpop.f32.mrf.mxu0
    %781 = vmatprep.mubr.f32.mxu0 0.0
    %782 = vmatmul.mubr.f32.gmra.mxu0 %v623
    %v783 = vpop.f32.mrf.mxu0
    %v784 = vadd.f32 %v495, %v783
    %v785 = vpop.f32.mrf.mxu0
    %786 = vmatprep.mubr.f32.mxu0 0.0
    %787 = vmatmul.mubr.f32.gmra.mxu0 %v625
    %v788 = vpop.f32.mrf.mxu0
    %v789 = vadd.f32 %v500, %v788
    %v790 = vpop.f32.mrf.mxu0
    %791 = vmatprep.mubr.f32.mxu0 0.0
    %792 = vmatmul.mubr.f32.gmra.mxu0 %v627
    %v793 = vpop.f32.mrf.mxu0
    %v794 = vadd.f32 %v505, %v793
    %v795 = vpop.f32.mrf.mxu0
    %796 = vmatprep.mubr.f32.mxu0 0.0
    %797 = vmatmul.mubr.f32.gmra.mxu0 %v629
    %v798 = vpop.f32.mrf.mxu0
    %v799 = vadd.f32 %v510, %v798
    %v800 = vpop.f32.mrf.mxu0
    %801 = vmatprep.mubr.f32.mxu0 0.0
    %802 = vmatmul.mubr.f32.gmra.mxu0 %v631
    %v803 = vpop.f32.mrf.mxu0
    %v804 = vadd.f32 %v515, %v803
    %v805 = vpop.f32.mrf.mxu0
    %806 = vmatprep.mubr.f32.mxu0 0.0
    %807 = vmatmul.mubr.f32.gmra.mxu0 %v633
    %v808 = vpop.f32.mrf.mxu0
    %v809 = vadd.f32 %v520, %v808
    %v810 = vpop.f32.mrf.mxu0
    %811 = vmatprep.mubr.f32.mxu0 0.0
    %812 = vmatmul.mubr.f32.gmra.mxu0 %v635
    %v813 = vpop.f32.mrf.mxu0
    %v814 = vadd.f32 %v525, %v813
    %v815 = vpop.f32.mrf.mxu0
    %816 = vmatprep.mubr.f32.mxu0 0.0
    %817 = vmatmul.mubr.f32.gmra.mxu0 %v637
    %v818 = vpop.f32.mrf.mxu0
    %v819 = vadd.f32 %v530, %v818
    %v820 = vpop.f32.mrf.mxu0
    %821 = vmatprep.mubr.f32.mxu0 0.0
    %822 = vmatmul.mubr.f32.gmra.mxu0 %v639
    %v823 = vpop.f32.mrf.mxu0
    %v824 = vadd.f32 %v535, %v823
    %v825 = vpop.f32.mrf.mxu0
    %826 = vmatprep.mubr.f32.mxu0 0.0
    %827 = vmatmul.mubr.f32.gmra.mxu0 %v641
    %v828 = vpop.f32.mrf.mxu0
    %v829 = vadd.f32 %v540, %v828
    %v830 = vpop.f32.mrf.mxu0
    %831 = vmatprep.mubr.f32.mxu0 0.0
    %832 = vmatmul.mubr.f32.gmra.mxu0 %v643
    %v833 = vpop.f32.mrf.mxu0
    %v834 = vadd.f32 %v545, %v833
    %v835 = vpop.f32.mrf.mxu0
    %836 = vmatprep.mubr.f32.mxu0 0.0
    %837 = vmatmul.mubr.f32.gmra.mxu0 %v645
    %v838 = vpop.f32.mrf.mxu0
    %v839 = vadd.f32 %v550, %v838
    %v840 = vpop.f32.mrf.mxu0
    %841 = vmatprep.mubr.f32.mxu0 0.0
    %842 = vmatmul.mubr.f32.gmra.mxu0 %v647
    %v843 = vpop.f32.mrf.mxu0
    %v844 = vadd.f32 %v555, %v843
    %v845 = vpop.f32.mrf.mxu0
    %846 = vmatprep.mubr.f32.mxu0 0.0
    %847 = vmatmul.mubr.f32.gmra.mxu0 %v649
    %v848 = vpop.f32.mrf.mxu0
    %v849 = vadd.f32 %v560, %v848
    %v850 = vpop.f32.mrf.mxu0
    %851 = vmatprep.mubr.f32.mxu0 0.0
    %852 = vmatmul.mubr.f32.gmra.mxu0 %v651
    %v853 = vpop.f32.mrf.mxu0
    %v854 = vadd.f32 %v565, %v853
    %v855 = vpop.f32.mrf.mxu0
    %856 = vmatprep.mubr.f32.mxu0 0.0
    %857 = vmatmul.mubr.f32.gmra.mxu0 %v653
    %v858 = vpop.f32.mrf.mxu0
    %v859 = vadd.f32 %v570, %v858
    %v860 = vpop.f32.mrf.mxu0
    %861 = vmatprep.mubr.f32.mxu0 0.0
    %862 = vmatmul.mubr.f32.gmra.mxu0 %v655
    %v863 = vpop.f32.mrf.mxu0
    %v864 = vadd.f32 %v575, %v863
    %v865 = vpop.f32.mrf.mxu0
    %866 = vmatprep.mubr.f32.mxu0 0.0
    %867 = vmatmul.mubr.f32.gmra.mxu0 %v657
    %v868 = vpop.f32.mrf.mxu0
    %v869 = vadd.f32 %v580, %v868
    %v870 = vpop.f32.mrf.mxu0
    %871 = vmatprep.mubr.f32.mxu0 0.0
    %872 = vmatmul.mubr.f32.gmra.mxu0 %v659
    %v873 = vpop.f32.mrf.mxu0
    %v874 = vadd.f32 %v585, %v873
    %v875 = vpop.f32.mrf.mxu0
    %876 = vmatprep.mubr.f32.mxu0 0.0
    %877 = vmatmul.mubr.f32.gmra.mxu0 %v661
    %v878 = vpop.f32.mrf.mxu0
    %v879 = vadd.f32 %v590, %v878
    %v880 = vpop.f32.mrf.mxu0
    %881 = vmatprep.mubr.f32.mxu0 0.0
    %882 = vmatmul.mubr.f32.gmra.mxu0 %v663
    %v883 = vpop.f32.mrf.mxu0
    %v884 = vadd.f32 %v595, %v883
    %v885 = vpop.f32.mrf.mxu0
    %886 = vmatprep.mubr.f32.mxu0 0.0
    %887 = vmatmul.mubr.f32.gmra.mxu0 %v665
    %v888 = vpop.f32.mrf.mxu0
    %v889 = vadd.f32 %v600, %v888
    %v890 = vpop.f32.mrf.mxu0
    %891 = vdwg.mxu0
    %vm892 = vcmask 1045504
    %v893 = vrot.slane %v127, 2
    %v894 = vrot.slane %v128, 2
    %v895 = vsel %vm892, %v893, %v894
    %v896 = vrot.slane %v129, 2
    %v897 = vsel %vm892, %v894, %v896
    %v898 = vrot.slane %v130, 2
    %v899 = vrot.slane %v131, 2
    %v900 = vsel %vm892, %v898, %v899
    %v901 = vrot.slane %v132, 2
    %v902 = vsel %vm892, %v899, %v901
    %v903 = vrot.slane %v133, 2
    %v904 = vrot.slane %v134, 2
    %v905 = vsel %vm892, %v903, %v904
    %v906 = vrot.slane %v135, 2
    %v907 = vsel %vm892, %v904, %v906
    %v908 = vrot.slane %v136, 2
    %v909 = vrot.slane %v137, 2
    %v910 = vsel %vm892, %v908, %v909
    %v911 = vrot.slane %v138, 2
    %v912 = vsel %vm892, %v909, %v911
    %v913 = vrot.slane %v139, 2
    %v914 = vrot.slane %v140, 2
    %v915 = vsel %vm892, %v913, %v914
    %v916 = vrot.slane %v141, 2
    %v917 = vsel %vm892, %v914, %v916
    %v918 = vrot.slane %v142, 2
    %v919 = vrot.slane %v143, 2
    %v920 = vsel %vm892, %v918, %v919
    %v921 = vrot.slane %v144, 2
    %v922 = vsel %vm892, %v919, %v921
    %v923 = vrot.slane %v145, 2
    %v924 = vrot.slane %v146, 2
    %v925 = vsel %vm892, %v923, %v924
    %v926 = vrot.slane %v147, 2
    %v927 = vsel %vm892, %v924, %v926
    %v928 = vrot.slane %v148, 2
    %v929 = vrot.slane %v149, 2
    %v930 = vsel %vm892, %v928, %v929
    %v931 = vrot.slane %v150, 2
    %v932 = vsel %vm892, %v929, %v931
    %v933 = vrot.slane %v151, 2
    %v934 = vrot.slane %v152, 2
    %v935 = vsel %vm892, %v933, %v934
    %v936 = vrot.slane %v153, 2
    %v937 = vsel %vm892, %v934, %v936
    %v938 = vrot.slane %v154, 2
    %v939 = vrot.slane %v155, 2
    %v940 = vsel %vm892, %v938, %v939
    %v941 = vrot.slane %v156, 2
    %v942 = vsel %vm892, %v939, %v941
    %v943 = vrot.slane %v157, 2
    %v944 = vrot.slane %v158, 2
    %v945 = vsel %vm892, %v943, %v944
    %v946 = vrot.slane %v159, 2
    %v947 = vsel %vm892, %v944, %v946
    %v948 = vrot.slane %v160, 2
    %v949 = vrot.slane %v161, 2
    %v950 = vsel %vm892, %v948, %v949
    %v951 = vrot.slane %v162, 2
    %v952 = vsel %vm892, %v949, %v951
    %v953 = vrot.slane %v163, 2
    %v954 = vrot.slane %v164, 2
    %v955 = vsel %vm892, %v953, %v954
    %v956 = vrot.slane %v165, 2
    %v957 = vsel %vm892, %v954, %v956
    %v958 = vrot.slane %v166, 2
    %v959 = vrot.slane %v167, 2
    %v960 = vsel %vm892, %v958, %v959
    %v961 = vrot.slane %v168, 2
    %v962 = vsel %vm892, %v959, %v961
    %v963 = vrot.slane %v169, 2
    %v964 = vrot.slane %v170, 2
    %v965 = vsel %vm892, %v963, %v964
    %v966 = vrot.slane %v171, 2
    %v967 = vsel %vm892, %v964, %v966
    %v968 = vrot.slane %v172, 2
    %v969 = vrot.slane %v173, 2
    %v970 = vsel %vm892, %v968, %v969
    %v971 = vrot.slane %v174, 2
    %v972 = vsel %vm892, %v969, %v971
    %s973 = scalar_lea.vmem [#allocation5], 64
    %v974 = vld [vmem:[%s973] sm:$0xff]
    %v975 = vld [vmem:[%s973 + $0x8] sm:$0xff]
    %v976 = vld [vmem:[%s973 + $0x10] sm:$0xff]
    %v977 = vld [vmem:[%s973 + $0x18] sm:$0xff]
    %v978 = vsel %vm313, %v895, 0
    %v980 = vsel %vm313, %v897, 0
    %v982 = vsel %vm313, %v900, 0
    %v984 = vsel %vm313, %v902, 0
    %v986 = vsel %vm313, %v905, 0
    %v988 = vsel %vm313, %v907, 0
    %v990 = vsel %vm313, %v910, 0
    %v992 = vsel %vm313, %v912, 0
    %v994 = vsel %vm313, %v915, 0
    %v996 = vsel %vm313, %v917, 0
    %v998 = vsel %vm313, %v920, 0
    %v1000 = vsel %vm313, %v922, 0
    %v1002 = vsel %vm313, %v925, 0
    %v1004 = vsel %vm313, %v927, 0
    %v1006 = vsel %vm313, %v930, 0
    %v1008 = vsel %vm313, %v932, 0
    %v1010 = vsel %vm313, %v935, 0
    %v1012 = vsel %vm313, %v937, 0
    %v1014 = vsel %vm313, %v940, 0
    %v1016 = vsel %vm313, %v942, 0
    %v1018 = vsel %vm313, %v945, 0
    %v1020 = vsel %vm313, %v947, 0
    %v1022 = vsel %vm313, %v950, 0
    %v1024 = vsel %vm313, %v952, 0
    %v1026 = vsel %vm313, %v955, 0
    %v1028 = vsel %vm313, %v957, 0
    %v1030 = vsel %vm313, %v960, 0
    %v1032 = vsel %vm313, %v962, 0
    %v1034 = vsel %vm313, %v965, 0
    %v1036 = vsel %vm313, %v967, 0
    %v1038 = vsel %vm313, %v970, 0
    %v1040 = vsel %vm313, %v972, 0
    %1042 = vmatprep.subr.mxu0 0.0
    %1043 = vmatpush1.msra.mxu0 0.0
    %1044 = vmatprep.subr.mxu0 0.0
    %1045 = vmatpush1.msra.mxu0 0.0
    %1046 = vmatprep.subr.mxu0 0.0
    %1047 = vmatpush1.msra.mxu0 0.0
    %1048 = vmatprep.subr.mxu0 0.0
    %1049 = vmatpush1.msra.mxu0 0.0
    %1050 = vmatprep.subr.mxu0 0.0
    %1051 = vmatpush1.msra.mxu0 0.0
    %1052 = vmatprep.subr.mxu0 0.0
    %1053 = vmatpush1.msra.mxu0 0.0
    %1054 = vmatprep.subr.mxu0 0.0
    %1055 = vmatpush1.msra.mxu0 0.0
    %1056 = vmatprep.subr.mxu0 0.0
    %1057 = vmatpush1.msra.mxu0 0.0
    %1058 = vmatprep.subr.mxu0 0.0
    %1059 = vmatpush1.msra.mxu0 0.0
    %1060 = vmatprep.subr.mxu0 0.0
    %1061 = vmatpush1.msra.mxu0 0.0
    %1062 = vmatprep.subr.mxu0 0.0
    %1063 = vmatpush1.msra.mxu0 0.0
    %1064 = vmatprep.subr.mxu0 0.0
    %1065 = vmatpush1.msra.mxu0 0.0
    %1066 = vmatprep.subr.mxu0 0.0
    %1067 = vmatpush1.msra.mxu0 %v977
    %1068 = vmatprep.subr.mxu0 0.0
    %1069 = vmatpush1.msra.mxu0 %v976
    %1070 = vmatprep.subr.mxu0 0.0
    %1071 = vmatpush1.msra.mxu0 %v975
    %1072 = vmatprep.subr.mxu0 0.0
    %1073 = vmatpush1.msra.mxu0 %v974
    %1074 = vmatprep.subr.mxu0 0.0
    %1075 = vmatpush2.msra.mxu0 0.0
    %1076 = vmatprep.subr.mxu0 0.0
    %1077 = vmatpush2.msra.mxu0 0.0
    %1078 = vmatprep.subr.mxu0 0.0
    %1079 = vmatpush2.msra.mxu0 0.0
    %1080 = vmatprep.subr.mxu0 0.0
    %1081 = vmatpush2.msra.mxu0 0.0
    %1082 = vmatprep.subr.mxu0 0.0
    %1083 = vmatpush2.msra.mxu0 0.0
    %1084 = vmatprep.subr.mxu0 0.0
    %1085 = vmatpush2.msra.mxu0 0.0
    %1086 = vmatprep.subr.mxu0 0.0
    %1087 = vmatpush2.msra.mxu0 0.0
    %1088 = vmatprep.subr.mxu0 0.0
    %1089 = vmatpush2.msra.mxu0 0.0
    %1090 = vmatprep.subr.mxu0 0.0
    %1091 = vmatpush2.msra.mxu0 0.0
    %1092 = vmatprep.subr.mxu0 0.0
    %1093 = vmatpush2.msra.mxu0 0.0
    %1094 = vmatprep.subr.mxu0 0.0
    %1095 = vmatpush2.msra.mxu0 0.0
    %1096 = vmatprep.subr.mxu0 0.0
    %1097 = vmatpush2.msra.mxu0 0.0
    %1098 = vmatprep.subr.mxu0 0.0
    %1099 = vmatpush2.msra.mxu0 0.0
    %1100 = vmatprep.subr.mxu0 0.0
    %1101 = vmatpush2.msra.mxu0 0.0
    %1102 = vmatprep.subr.mxu0 0.0
    %1103 = vmatpush2.msra.mxu0 0.0
    %1104 = vmatprep.subr.mxu0 0.0
    %1105 = vmatpush2.msra.mxu0 0.0
    %1106 = vmatprep.mubr.f32.mxu0 0.0
    %1107 = vmatmul.mubr.f32.gmra.mxu0 %v978
    %v1108 = vpop.f32.mrf.mxu0
    %v1109 = vadd.f32 0.0, %v1108
    %v1110 = vpop.f32.mrf.mxu0
    %1111 = vmatprep.mubr.f32.mxu0 0.0
    %1112 = vmatmul.mubr.f32.gmra.mxu0 %v980
    %v1113 = vpop.f32.mrf.mxu0
    %v1114 = vadd.f32 0.0, %v1113
    %v1115 = vpop.f32.mrf.mxu0
    %1116 = vmatprep.mubr.f32.mxu0 0.0
    %1117 = vmatmul.mubr.f32.gmra.mxu0 %v982
    %v1118 = vpop.f32.mrf.mxu0
    %v1119 = vadd.f32 0.0, %v1118
    %v1120 = vpop.f32.mrf.mxu0
    %1121 = vmatprep.mubr.f32.mxu0 0.0
    %1122 = vmatmul.mubr.f32.gmra.mxu0 %v984
    %v1123 = vpop.f32.mrf.mxu0
    %v1124 = vadd.f32 0.0, %v1123
    %v1125 = vpop.f32.mrf.mxu0
    %1126 = vmatprep.mubr.f32.mxu0 0.0
    %1127 = vmatmul.mubr.f32.gmra.mxu0 %v986
    %v1128 = vpop.f32.mrf.mxu0
    %v1129 = vadd.f32 0.0, %v1128
    %v1130 = vpop.f32.mrf.mxu0
    %1131 = vmatprep.mubr.f32.mxu0 0.0
    %1132 = vmatmul.mubr.f32.gmra.mxu0 %v988
    %v1133 = vpop.f32.mrf.mxu0
    %v1134 = vadd.f32 0.0, %v1133
    %v1135 = vpop.f32.mrf.mxu0
    %1136 = vmatprep.mubr.f32.mxu0 0.0
    %1137 = vmatmul.mubr.f32.gmra.mxu0 %v990
    %v1138 = vpop.f32.mrf.mxu0
    %v1139 = vadd.f32 0.0, %v1138
    %v1140 = vpop.f32.mrf.mxu0
    %1141 = vmatprep.mubr.f32.mxu0 0.0
    %1142 = vmatmul.mubr.f32.gmra.mxu0 %v992
    %v1143 = vpop.f32.mrf.mxu0
    %v1144 = vadd.f32 0.0, %v1143
    %v1145 = vpop.f32.mrf.mxu0
    %1146 = vmatprep.mubr.f32.mxu0 0.0
    %1147 = vmatmul.mubr.f32.gmra.mxu0 %v994
    %v1148 = vpop.f32.mrf.mxu0
    %v1149 = vadd.f32 0.0, %v1148
    %v1150 = vpop.f32.mrf.mxu0
    %1151 = vmatprep.mubr.f32.mxu0 0.0
    %1152 = vmatmul.mubr.f32.gmra.mxu0 %v996
    %v1153 = vpop.f32.mrf.mxu0
    %v1154 = vadd.f32 0.0, %v1153
    %v1155 = vpop.f32.mrf.mxu0
    %1156 = vmatprep.mubr.f32.mxu0 0.0
    %1157 = vmatmul.mubr.f32.gmra.mxu0 %v998
    %v1158 = vpop.f32.mrf.mxu0
    %v1159 = vadd.f32 0.0, %v1158
    %v1160 = vpop.f32.mrf.mxu0
    %1161 = vmatprep.mubr.f32.mxu0 0.0
    %1162 = vmatmul.mubr.f32.gmra.mxu0 %v1000
    %v1163 = vpop.f32.mrf.mxu0
    %v1164 = vadd.f32 0.0, %v1163
    %v1165 = vpop.f32.mrf.mxu0
    %1166 = vmatprep.mubr.f32.mxu0 0.0
    %1167 = vmatmul.mubr.f32.gmra.mxu0 %v1002
    %v1168 = vpop.f32.mrf.mxu0
    %v1169 = vadd.f32 0.0, %v1168
    %v1170 = vpop.f32.mrf.mxu0
    %1171 = vmatprep.mubr.f32.mxu0 0.0
    %1172 = vmatmul.mubr.f32.gmra.mxu0 %v1004
    %v1173 = vpop.f32.mrf.mxu0
    %v1174 = vadd.f32 0.0, %v1173
    %v1175 = vpop.f32.mrf.mxu0
    %1176 = vmatprep.mubr.f32.mxu0 0.0
    %1177 = vmatmul.mubr.f32.gmra.mxu0 %v1006
    %v1178 = vpop.f32.mrf.mxu0
    %v1179 = vadd.f32 0.0, %v1178
    %v1180 = vpop.f32.mrf.mxu0
    %1181 = vmatprep.mubr.f32.mxu0 0.0
    %1182 = vmatmul.mubr.f32.gmra.mxu0 %v1008
    %v1183 = vpop.f32.mrf.mxu0
    %v1184 = vadd.f32 0.0, %v1183
    %v1185 = vpop.f32.mrf.mxu0
    %1186 = vmatprep.mubr.f32.mxu0 0.0
    %1187 = vmatmul.mubr.f32.gmra.mxu0 %v1010
    %v1188 = vpop.f32.mrf.mxu0
    %v1189 = vadd.f32 0.0, %v1188
    %v1190 = vpop.f32.mrf.mxu0
    %1191 = vmatprep.mubr.f32.mxu0 0.0
    %1192 = vmatmul.mubr.f32.gmra.mxu0 %v1012
    %v1193 = vpop.f32.mrf.mxu0
    %v1194 = vadd.f32 0.0, %v1193
    %v1195 = vpop.f32.mrf.mxu0
    %1196 = vmatprep.mubr.f32.mxu0 0.0
    %1197 = vmatmul.mubr.f32.gmra.mxu0 %v1014
    %v1198 = vpop.f32.mrf.mxu0
    %v1199 = vadd.f32 0.0, %v1198
    %v1200 = vpop.f32.mrf.mxu0
    %1201 = vmatprep.mubr.f32.mxu0 0.0
    %1202 = vmatmul.mubr.f32.gmra.mxu0 %v1016
    %v1203 = vpop.f32.mrf.mxu0
    %v1204 = vadd.f32 0.0, %v1203
    %v1205 = vpop.f32.mrf.mxu0
    %1206 = vmatprep.mubr.f32.mxu0 0.0
    %1207 = vmatmul.mubr.f32.gmra.mxu0 %v1018
    %v1208 = vpop.f32.mrf.mxu0
    %v1209 = vadd.f32 0.0, %v1208
    %v1210 = vpop.f32.mrf.mxu0
    %1211 = vmatprep.mubr.f32.mxu0 0.0
    %1212 = vmatmul.mubr.f32.gmra.mxu0 %v1020
    %v1213 = vpop.f32.mrf.mxu0
    %v1214 = vadd.f32 0.0, %v1213
    %v1215 = vpop.f32.mrf.mxu0
    %1216 = vmatprep.mubr.f32.mxu0 0.0
    %1217 = vmatmul.mubr.f32.gmra.mxu0 %v1022
    %v1218 = vpop.f32.mrf.mxu0
    %v1219 = vadd.f32 0.0, %v1218
    %v1220 = vpop.f32.mrf.mxu0
    %1221 = vmatprep.mubr.f32.mxu0 0.0
    %1222 = vmatmul.mubr.f32.gmra.mxu0 %v1024
    %v1223 = vpop.f32.mrf.mxu0
    %v1224 = vadd.f32 0.0, %v1223
    %v1225 = vpop.f32.mrf.mxu0
    %1226 = vmatprep.mubr.f32.mxu0 0.0
    %1227 = vmatmul.mubr.f32.gmra.mxu0 %v1026
    %v1228 = vpop.f32.mrf.mxu0
    %v1229 = vadd.f32 0.0, %v1228
    %v1230 = vpop.f32.mrf.mxu0
    %1231 = vmatprep.mubr.f32.mxu0 0.0
    %1232 = vmatmul.mubr.f32.gmra.mxu0 %v1028
    %v1233 = vpop.f32.mrf.mxu0
    %v1234 = vadd.f32 0.0, %v1233
    %v1235 = vpop.f32.mrf.mxu0
    %1236 = vmatprep.mubr.f32.mxu0 0.0
    %1237 = vmatmul.mubr.f32.gmra.mxu0 %v1030
    %v1238 = vpop.f32.mrf.mxu0
    %v1239 = vadd.f32 0.0, %v1238
    %v1240 = vpop.f32.mrf.mxu0
    %1241 = vmatprep.mubr.f32.mxu0 0.0
    %1242 = vmatmul.mubr.f32.gmra.mxu0 %v1032
    %v1243 = vpop.f32.mrf.mxu0
    %v1244 = vadd.f32 0.0, %v1243
    %v1245 = vpop.f32.mrf.mxu0
    %1246 = vmatprep.mubr.f32.mxu0 0.0
    %1247 = vmatmul.mubr.f32.gmra.mxu0 %v1034
    %v1248 = vpop.f32.mrf.mxu0
    %v1249 = vadd.f32 0.0, %v1248
    %v1250 = vpop.f32.mrf.mxu0
    %1251 = vmatprep.mubr.f32.mxu0 0.0
    %1252 = vmatmul.mubr.f32.gmra.mxu0 %v1036
    %v1253 = vpop.f32.mrf.mxu0
    %v1254 = vadd.f32 0.0, %v1253
    %v1255 = vpop.f32.mrf.mxu0
    %1256 = vmatprep.mubr.f32.mxu0 0.0
    %1257 = vmatmul.mubr.f32.gmra.mxu0 %v1038
    %v1258 = vpop.f32.mrf.mxu0
    %v1259 = vadd.f32 0.0, %v1258
    %v1260 = vpop.f32.mrf.mxu0
    %1261 = vmatprep.mubr.f32.mxu0 0.0
    %1262 = vmatmul.mubr.f32.gmra.mxu0 %v1040
    %v1263 = vpop.f32.mrf.mxu0
    %v1264 = vadd.f32 0.0, %v1263
    %v1265 = vpop.f32.mrf.mxu0
    %1266 = vdwg.mxu0
    %v1267 = vadd.f32 %v734, %v1109
    %v1268 = vadd.f32 %v739, %v1114
    %v1269 = vadd.f32 %v744, %v1119
    %v1270 = vadd.f32 %v749, %v1124
    %v1271 = vadd.f32 %v754, %v1129
    %v1272 = vadd.f32 %v759, %v1134
    %v1273 = vadd.f32 %v764, %v1139
    %v1274 = vadd.f32 %v769, %v1144
    %v1275 = vadd.f32 %v774, %v1149
    %v1276 = vadd.f32 %v779, %v1154
    %v1277 = vadd.f32 %v784, %v1159
    %v1278 = vadd.f32 %v789, %v1164
    %v1279 = vadd.f32 %v794, %v1169
    %v1280 = vadd.f32 %v799, %v1174
    %v1281 = vadd.f32 %v804, %v1179
    %v1282 = vadd.f32 %v809, %v1184
    %v1283 = vadd.f32 %v814, %v1189
    %v1284 = vadd.f32 %v819, %v1194
    %v1285 = vadd.f32 %v824, %v1199
    %v1286 = vadd.f32 %v829, %v1204
    %v1287 = vadd.f32 %v834, %v1209
    %v1288 = vadd.f32 %v839, %v1214
    %v1289 = vadd.f32 %v844, %v1219
    %v1290 = vadd.f32 %v849, %v1224
    %v1291 = vadd.f32 %v854, %v1229
    %v1292 = vadd.f32 %v859, %v1234
    %v1293 = vadd.f32 %v864, %v1239
    %v1294 = vadd.f32 %v869, %v1244
    %v1295 = vadd.f32 %v874, %v1249
    %v1296 = vadd.f32 %v879, %v1254
    %v1297 = vadd.f32 %v884, %v1259
    %v1298 = vadd.f32 %v889, %v1264
    %vm1299 = vcmask 1044480
    %v1300 = vrot.slane %v127, 3
    %v1301 = vrot.slane %v128, 3
    %v1302 = vsel %vm1299, %v1300, %v1301
    %v1303 = vrot.slane %v129, 3
    %v1304 = vsel %vm1299, %v1301, %v1303
    %v1305 = vrot.slane %v130, 3
    %v1306 = vrot.slane %v131, 3
    %v1307 = vsel %vm1299, %v1305, %v1306
    %v1308 = vrot.slane %v132, 3
    %v1309 = vsel %vm1299, %v1306, %v1308
    %v1310 = vrot.slane %v133, 3
    %v1311 = vrot.slane %v134, 3
    %v1312 = vsel %vm1299, %v1310, %v1311
    %v1313 = vrot.slane %v135, 3
    %v1314 = vsel %vm1299, %v1311, %v1313
    %v1315 = vrot.slane %v136, 3
    %v1316 = vrot.slane %v137, 3
    %v1317 = vsel %vm1299, %v1315, %v1316
    %v1318 = vrot.slane %v138, 3
    %v1319 = vsel %vm1299, %v1316, %v1318
    %v1320 = vrot.slane %v139, 3
    %v1321 = vrot.slane %v140, 3
    %v1322 = vsel %vm1299, %v1320, %v1321
    %v1323 = vrot.slane %v141, 3
    %v1324 = vsel %vm1299, %v1321, %v1323
    %v1325 = vrot.slane %v142, 3
    %v1326 = vrot.slane %v143, 3
    %v1327 = vsel %vm1299, %v1325, %v1326
    %v1328 = vrot.slane %v144, 3
    %v1329 = vsel %vm1299, %v1326, %v1328
    %v1330 = vrot.slane %v145, 3
    %v1331 = vrot.slane %v146, 3
    %v1332 = vsel %vm1299, %v1330, %v1331
    %v1333 = vrot.slane %v147, 3
    %v1334 = vsel %vm1299, %v1331, %v1333
    %v1335 = vrot.slane %v148, 3
    %v1336 = vrot.slane %v149, 3
    %v1337 = vsel %vm1299, %v1335, %v1336
    %v1338 = vrot.slane %v150, 3
    %v1339 = vsel %vm1299, %v1336, %v1338
    %v1340 = vrot.slane %v151, 3
    %v1341 = vrot.slane %v152, 3
    %v1342 = vsel %vm1299, %v1340, %v1341
    %v1343 = vrot.slane %v153, 3
    %v1344 = vsel %vm1299, %v1341, %v1343
    %v1345 = vrot.slane %v154, 3
    %v1346 = vrot.slane %v155, 3
    %v1347 = vsel %vm1299, %v1345, %v1346
    %v1348 = vrot.slane %v156, 3
    %v1349 = vsel %vm1299, %v1346, %v1348
    %v1350 = vrot.slane %v157, 3
    %v1351 = vrot.slane %v158, 3
    %v1352 = vsel %vm1299, %v1350, %v1351
    %v1353 = vrot.slane %v159, 3
    %v1354 = vsel %vm1299, %v1351, %v1353
    %v1355 = vrot.slane %v160, 3
    %v1356 = vrot.slane %v161, 3
    %v1357 = vsel %vm1299, %v1355, %v1356
    %v1358 = vrot.slane %v162, 3
    %v1359 = vsel %vm1299, %v1356, %v1358
    %v1360 = vrot.slane %v163, 3
    %v1361 = vrot.slane %v164, 3
    %v1362 = vsel %vm1299, %v1360, %v1361
    %v1363 = vrot.slane %v165, 3
    %v1364 = vsel %vm1299, %v1361, %v1363
    %v1365 = vrot.slane %v166, 3
    %v1366 = vrot.slane %v167, 3
    %v1367 = vsel %vm1299, %v1365, %v1366
    %v1368 = vrot.slane %v168, 3
    %v1369 = vsel %vm1299, %v1366, %v1368
    %v1370 = vrot.slane %v169, 3
    %v1371 = vrot.slane %v170, 3
    %v1372 = vsel %vm1299, %v1370, %v1371
    %v1373 = vrot.slane %v171, 3
    %v1374 = vsel %vm1299, %v1371, %v1373
    %v1375 = vrot.slane %v172, 3
    %v1376 = vrot.slane %v173, 3
    %v1377 = vsel %vm1299, %v1375, %v1376
    %v1378 = vrot.slane %v174, 3
    %v1379 = vsel %vm1299, %v1376, %v1378
    %s1380 = scalar_lea.vmem [#allocation5], 96
    %v1381 = vld [vmem:[%s1380] sm:$0xff]
    %v1382 = vld [vmem:[%s1380 + $0x8] sm:$0xff]
    %v1383 = vld [vmem:[%s1380 + $0x10] sm:$0xff]
    %v1384 = vld [vmem:[%s1380 + $0x18] sm:$0xff]
    %v1385 = vsel %vm313, %v1302, 0
    %v1387 = vsel %vm313, %v1304, 0
    %v1389 = vsel %vm313, %v1307, 0
    %v1391 = vsel %vm313, %v1309, 0
    %v1393 = vsel %vm313, %v1312, 0
    %v1395 = vsel %vm313, %v1314, 0
    %v1397 = vsel %vm313, %v1317, 0
    %v1399 = vsel %vm313, %v1319, 0
    %v1401 = vsel %vm313, %v1322, 0
    %v1403 = vsel %vm313, %v1324, 0
    %v1405 = vsel %vm313, %v1327, 0
    %v1407 = vsel %vm313, %v1329, 0
    %v1409 = vsel %vm313, %v1332, 0
    %v1411 = vsel %vm313, %v1334, 0
    %v1413 = vsel %vm313, %v1337, 0
    %v1415 = vsel %vm313, %v1339, 0
    %v1417 = vsel %vm313, %v1342, 0
    %v1419 = vsel %vm313, %v1344, 0
    %v1421 = vsel %vm313, %v1347, 0
    %v1423 = vsel %vm313, %v1349, 0
    %v1425 = vsel %vm313, %v1352, 0
    %v1427 = vsel %vm313, %v1354, 0
    %v1429 = vsel %vm313, %v1357, 0
    %v1431 = vsel %vm313, %v1359, 0
    %v1433 = vsel %vm313, %v1362, 0
    %v1435 = vsel %vm313, %v1364, 0
    %v1437 = vsel %vm313, %v1367, 0
    %v1439 = vsel %vm313, %v1369, 0
    %v1441 = vsel %vm313, %v1372, 0
    %v1443 = vsel %vm313, %v1374, 0
    %v1445 = vsel %vm313, %v1377, 0
    %v1447 = vsel %vm313, %v1379, 0
    %1449 = vmatprep.subr.mxu0 0.0
    %1450 = vmatpush1.msra.mxu0 0.0
    %1451 = vmatprep.subr.mxu0 0.0
    %1452 = vmatpush1.msra.mxu0 0.0
    %1453 = vmatprep.subr.mxu0 0.0
    %1454 = vmatpush1.msra.mxu0 0.0
    %1455 = vmatprep.subr.mxu0 0.0
    %1456 = vmatpush1.msra.mxu0 0.0
    %1457 = vmatprep.subr.mxu0 0.0
    %1458 = vmatpush1.msra.mxu0 0.0
    %1459 = vmatprep.subr.mxu0 0.0
    %1460 = vmatpush1.msra.mxu0 0.0
    %1461 = vmatprep.subr.mxu0 0.0
    %1462 = vmatpush1.msra.mxu0 0.0
    %1463 = vmatprep.subr.mxu0 0.0
    %1464 = vmatpush1.msra.mxu0 0.0
    %1465 = vmatprep.subr.mxu0 0.0
    %1466 = vmatpush1.msra.mxu0 0.0
    %1467 = vmatprep.subr.mxu0 0.0
    %1468 = vmatpush1.msra.mxu0 0.0
    %1469 = vmatprep.subr.mxu0 0.0
    %1470 = vmatpush1.msra.mxu0 0.0
    %1471 = vmatprep.subr.mxu0 0.0
    %1472 = vmatpush1.msra.mxu0 0.0
    %1473 = vmatprep.subr.mxu0 0.0
    %1474 = vmatpush1.msra.mxu0 %v1384
    %1475 = vmatprep.subr.mxu0 0.0
    %1476 = vmatpush1.msra.mxu0 %v1383
    %1477 = vmatprep.subr.mxu0 0.0
    %1478 = vmatpush1.msra.mxu0 %v1382
    %1479 = vmatprep.subr.mxu0 0.0
    %1480 = vmatpush1.msra.mxu0 %v1381
    %1481 = vmatprep.subr.mxu0 0.0
    %1482 = vmatpush2.msra.mxu0 0.0
    %1483 = vmatprep.subr.mxu0 0.0
    %1484 = vmatpush2.msra.mxu0 0.0
    %1485 = vmatprep.subr.mxu0 0.0
    %1486 = vmatpush2.msra.mxu0 0.0
    %1487 = vmatprep.subr.mxu0 0.0
    %1488 = vmatpush2.msra.mxu0 0.0
    %1489 = vmatprep.subr.mxu0 0.0
    %1490 = vmatpush2.msra.mxu0 0.0
    %1491 = vmatprep.subr.mxu0 0.0
    %1492 = vmatpush2.msra.mxu0 0.0
    %1493 = vmatprep.subr.mxu0 0.0
    %1494 = vmatpush2.msra.mxu0 0.0
    %1495 = vmatprep.subr.mxu0 0.0
    %1496 = vmatpush2.msra.mxu0 0.0
    %1497 = vmatprep.subr.mxu0 0.0
    %1498 = vmatpush2.msra.mxu0 0.0
    %1499 = vmatprep.subr.mxu0 0.0
    %1500 = vmatpush2.msra.mxu0 0.0
    %1501 = vmatprep.subr.mxu0 0.0
    %1502 = vmatpush2.msra.mxu0 0.0
    %1503 = vmatprep.subr.mxu0 0.0
    %1504 = vmatpush2.msra.mxu0 0.0
    %1505 = vmatprep.subr.mxu0 0.0
    %1506 = vmatpush2.msra.mxu0 0.0
    %1507 = vmatprep.subr.mxu0 0.0
    %1508 = vmatpush2.msra.mxu0 0.0
    %1509 = vmatprep.subr.mxu0 0.0
    %1510 = vmatpush2.msra.mxu0 0.0
    %1511 = vmatprep.subr.mxu0 0.0
    %1512 = vmatpush2.msra.mxu0 0.0
    %1513 = vmatprep.mubr.f32.mxu0 0.0
    %1514 = vmatmul.mubr.f32.gmra.mxu0 %v1385
    %v1515 = vpop.f32.mrf.mxu0
    %v1516 = vadd.f32 0.0, %v1515
    %v1517 = vpop.f32.mrf.mxu0
    %1518 = vmatprep.mubr.f32.mxu0 0.0
    %1519 = vmatmul.mubr.f32.gmra.mxu0 %v1387
    %v1520 = vpop.f32.mrf.mxu0
    %v1521 = vadd.f32 0.0, %v1520
    %v1522 = vpop.f32.mrf.mxu0
    %1523 = vmatprep.mubr.f32.mxu0 0.0
    %1524 = vmatmul.mubr.f32.gmra.mxu0 %v1389
    %v1525 = vpop.f32.mrf.mxu0
    %v1526 = vadd.f32 0.0, %v1525
    %v1527 = vpop.f32.mrf.mxu0
    %1528 = vmatprep.mubr.f32.mxu0 0.0
    %1529 = vmatmul.mubr.f32.gmra.mxu0 %v1391
    %v1530 = vpop.f32.mrf.mxu0
    %v1531 = vadd.f32 0.0, %v1530
    %v1532 = vpop.f32.mrf.mxu0
    %1533 = vmatprep.mubr.f32.mxu0 0.0
    %1534 = vmatmul.mubr.f32.gmra.mxu0 %v1393
    %v1535 = vpop.f32.mrf.mxu0
    %v1536 = vadd.f32 0.0, %v1535
    %v1537 = vpop.f32.mrf.mxu0
    %1538 = vmatprep.mubr.f32.mxu0 0.0
    %1539 = vmatmul.mubr.f32.gmra.mxu0 %v1395
    %v1540 = vpop.f32.mrf.mxu0
    %v1541 = vadd.f32 0.0, %v1540
    %v1542 = vpop.f32.mrf.mxu0
    %1543 = vmatprep.mubr.f32.mxu0 0.0
    %1544 = vmatmul.mubr.f32.gmra.mxu0 %v1397
    %v1545 = vpop.f32.mrf.mxu0
    %v1546 = vadd.f32 0.0, %v1545
    %v1547 = vpop.f32.mrf.mxu0
    %1548 = vmatprep.mubr.f32.mxu0 0.0
    %1549 = vmatmul.mubr.f32.gmra.mxu0 %v1399
    %v1550 = vpop.f32.mrf.mxu0
    %v1551 = vadd.f32 0.0, %v1550
    %v1552 = vpop.f32.mrf.mxu0
    %1553 = vmatprep.mubr.f32.mxu0 0.0
    %1554 = vmatmul.mubr.f32.gmra.mxu0 %v1401
    %v1555 = vpop.f32.mrf.mxu0
    %v1556 = vadd.f32 0.0, %v1555
    %v1557 = vpop.f32.mrf.mxu0
    %1558 = vmatprep.mubr.f32.mxu0 0.0
    %1559 = vmatmul.mubr.f32.gmra.mxu0 %v1403
    %v1560 = vpop.f32.mrf.mxu0
    %v1561 = vadd.f32 0.0, %v1560
    %v1562 = vpop.f32.mrf.mxu0
    %1563 = vmatprep.mubr.f32.mxu0 0.0
    %1564 = vmatmul.mubr.f32.gmra.mxu0 %v1405
    %v1565 = vpop.f32.mrf.mxu0
    %v1566 = vadd.f32 0.0, %v1565
    %v1567 = vpop.f32.mrf.mxu0
    %1568 = vmatprep.mubr.f32.mxu0 0.0
    %1569 = vmatmul.mubr.f32.gmra.mxu0 %v1407
    %v1570 = vpop.f32.mrf.mxu0
    %v1571 = vadd.f32 0.0, %v1570
    %v1572 = vpop.f32.mrf.mxu0
    %1573 = vmatprep.mubr.f32.mxu0 0.0
    %1574 = vmatmul.mubr.f32.gmra.mxu0 %v1409
    %v1575 = vpop.f32.mrf.mxu0
    %v1576 = vadd.f32 0.0, %v1575
    %v1577 = vpop.f32.mrf.mxu0
    %1578 = vmatprep.mubr.f32.mxu0 0.0
    %1579 = vmatmul.mubr.f32.gmra.mxu0 %v1411
    %v1580 = vpop.f32.mrf.mxu0
    %v1581 = vadd.f32 0.0, %v1580
    %v1582 = vpop.f32.mrf.mxu0
    %1583 = vmatprep.mubr.f32.mxu0 0.0
    %1584 = vmatmul.mubr.f32.gmra.mxu0 %v1413
    %v1585 = vpop.f32.mrf.mxu0
    %v1586 = vadd.f32 0.0, %v1585
    %v1587 = vpop.f32.mrf.mxu0
    %1588 = vmatprep.mubr.f32.mxu0 0.0
    %1589 = vmatmul.mubr.f32.gmra.mxu0 %v1415
    %v1590 = vpop.f32.mrf.mxu0
    %v1591 = vadd.f32 0.0, %v1590
    %v1592 = vpop.f32.mrf.mxu0
    %1593 = vmatprep.mubr.f32.mxu0 0.0
    %1594 = vmatmul.mubr.f32.gmra.mxu0 %v1417
    %v1595 = vpop.f32.mrf.mxu0
    %v1596 = vadd.f32 0.0, %v1595
    %v1597 = vpop.f32.mrf.mxu0
    %1598 = vmatprep.mubr.f32.mxu0 0.0
    %1599 = vmatmul.mubr.f32.gmra.mxu0 %v1419
    %v1600 = vpop.f32.mrf.mxu0
    %v1601 = vadd.f32 0.0, %v1600
    %v1602 = vpop.f32.mrf.mxu0
    %1603 = vmatprep.mubr.f32.mxu0 0.0
    %1604 = vmatmul.mubr.f32.gmra.mxu0 %v1421
    %v1605 = vpop.f32.mrf.mxu0
    %v1606 = vadd.f32 0.0, %v1605
    %v1607 = vpop.f32.mrf.mxu0
    %1608 = vmatprep.mubr.f32.mxu0 0.0
    %1609 = vmatmul.mubr.f32.gmra.mxu0 %v1423
    %v1610 = vpop.f32.mrf.mxu0
    %v1611 = vadd.f32 0.0, %v1610
    %v1612 = vpop.f32.mrf.mxu0
    %1613 = vmatprep.mubr.f32.mxu0 0.0
    %1614 = vmatmul.mubr.f32.gmra.mxu0 %v1425
    %v1615 = vpop.f32.mrf.mxu0
    %v1616 = vadd.f32 0.0, %v1615
    %v1617 = vpop.f32.mrf.mxu0
    %1618 = vmatprep.mubr.f32.mxu0 0.0
    %1619 = vmatmul.mubr.f32.gmra.mxu0 %v1427
    %v1620 = vpop.f32.mrf.mxu0
    %v1621 = vadd.f32 0.0, %v1620
    %v1622 = vpop.f32.mrf.mxu0
    %1623 = vmatprep.mubr.f32.mxu0 0.0
    %1624 = vmatmul.mubr.f32.gmra.mxu0 %v1429
    %v1625 = vpop.f32.mrf.mxu0
    %v1626 = vadd.f32 0.0, %v1625
    %v1627 = vpop.f32.mrf.mxu0
    %1628 = vmatprep.mubr.f32.mxu0 0.0
    %1629 = vmatmul.mubr.f32.gmra.mxu0 %v1431
    %v1630 = vpop.f32.mrf.mxu0
    %v1631 = vadd.f32 0.0, %v1630
    %v1632 = vpop.f32.mrf.mxu0
    %1633 = vmatprep.mubr.f32.mxu0 0.0
    %1634 = vmatmul.mubr.f32.gmra.mxu0 %v1433
    %v1635 = vpop.f32.mrf.mxu0
    %v1636 = vadd.f32 0.0, %v1635
    %v1637 = vpop.f32.mrf.mxu0
    %1638 = vmatprep.mubr.f32.mxu0 0.0
    %1639 = vmatmul.mubr.f32.gmra.mxu0 %v1435
    %v1640 = vpop.f32.mrf.mxu0
    %v1641 = vadd.f32 0.0, %v1640
    %v1642 = vpop.f32.mrf.mxu0
    %1643 = vmatprep.mubr.f32.mxu0 0.0
    %1644 = vmatmul.mubr.f32.gmra.mxu0 %v1437
    %v1645 = vpop.f32.mrf.mxu0
    %v1646 = vadd.f32 0.0, %v1645
    %v1647 = vpop.f32.mrf.mxu0
    %1648 = vmatprep.mubr.f32.mxu0 0.0
    %1649 = vmatmul.mubr.f32.gmra.mxu0 %v1439
    %v1650 = vpop.f32.mrf.mxu0
    %v1651 = vadd.f32 0.0, %v1650
    %v1652 = vpop.f32.mrf.mxu0
    %1653 = vmatprep.mubr.f32.mxu0 0.0
    %1654 = vmatmul.mubr.f32.gmra.mxu0 %v1441
    %v1655 = vpop.f32.mrf.mxu0
    %v1656 = vadd.f32 0.0, %v1655
    %v1657 = vpop.f32.mrf.mxu0
    %1658 = vmatprep.mubr.f32.mxu0 0.0
    %1659 = vmatmul.mubr.f32.gmra.mxu0 %v1443
    %v1660 = vpop.f32.mrf.mxu0
    %v1661 = vadd.f32 0.0, %v1660
    %v1662 = vpop.f32.mrf.mxu0
    %1663 = vmatprep.mubr.f32.mxu0 0.0
    %1664 = vmatmul.mubr.f32.gmra.mxu0 %v1445
    %v1665 = vpop.f32.mrf.mxu0
    %v1666 = vadd.f32 0.0, %v1665
    %v1667 = vpop.f32.mrf.mxu0
    %1668 = vmatprep.mubr.f32.mxu0 0.0
    %1669 = vmatmul.mubr.f32.gmra.mxu0 %v1447
    %v1670 = vpop.f32.mrf.mxu0
    %v1671 = vadd.f32 0.0, %v1670
    %v1672 = vpop.f32.mrf.mxu0
    %1673 = vdwg.mxu0
    %v1674 = vadd.f32 %v1267, %v1516
    %v1675 = vadd.f32 %v1268, %v1521
    %v1676 = vadd.f32 %v1269, %v1526
    %v1677 = vadd.f32 %v1270, %v1531
    %v1678 = vadd.f32 %v1271, %v1536
    %v1679 = vadd.f32 %v1272, %v1541
    %v1680 = vadd.f32 %v1273, %v1546
    %v1681 = vadd.f32 %v1274, %v1551
    %v1682 = vadd.f32 %v1275, %v1556
    %v1683 = vadd.f32 %v1276, %v1561
    %v1684 = vadd.f32 %v1277, %v1566
    %v1685 = vadd.f32 %v1278, %v1571
    %v1686 = vadd.f32 %v1279, %v1576
    %v1687 = vadd.f32 %v1280, %v1581
    %v1688 = vadd.f32 %v1281, %v1586
    %v1689 = vadd.f32 %v1282, %v1591
    %v1690 = vadd.f32 %v1283, %v1596
    %v1691 = vadd.f32 %v1284, %v1601
    %v1692 = vadd.f32 %v1285, %v1606
    %v1693 = vadd.f32 %v1286, %v1611
    %v1694 = vadd.f32 %v1287, %v1616
    %v1695 = vadd.f32 %v1288, %v1621
    %v1696 = vadd.f32 %v1289, %v1626
    %v1697 = vadd.f32 %v1290, %v1631
    %v1698 = vadd.f32 %v1291, %v1636
    %v1699 = vadd.f32 %v1292, %v1641
    %v1700 = vadd.f32 %v1293, %v1646
    %v1701 = vadd.f32 %v1294, %v1651
    %v1702 = vadd.f32 %v1295, %v1656
    %v1703 = vadd.f32 %v1296, %v1661
    %v1704 = vadd.f32 %v1297, %v1666
    %v1705 = vadd.f32 %v1298, %v1671
    %v1706 = vld [vmem:[%s2] sm:$0x1]
    %v1708 = vlaneseq
    %v1709 = vshrl.u32 %v1708, 7
    %v1710 = vsub.s32 0, %v1709
    %v1711 = vrot.slane %v1706, %v1710
    %v1713 = vadd.f32 %v1674, %v1711
    %v1714 = vadd.f32 %v1675, %v1711
    %v1715 = vadd.f32 %v1676, %v1711
    %v1716 = vadd.f32 %v1677, %v1711
    %v1717 = vadd.f32 %v1678, %v1711
    %v1718 = vadd.f32 %v1679, %v1711
    %v1719 = vadd.f32 %v1680, %v1711
    %v1720 = vadd.f32 %v1681, %v1711
    %v1721 = vadd.f32 %v1682, %v1711
    %v1722 = vadd.f32 %v1683, %v1711
    %v1723 = vadd.f32 %v1684, %v1711
    %v1724 = vadd.f32 %v1685, %v1711
    %v1725 = vadd.f32 %v1686, %v1711
    %v1726 = vadd.f32 %v1687, %v1711
    %v1727 = vadd.f32 %v1688, %v1711
    %v1728 = vadd.f32 %v1689, %v1711
    %v1729 = vadd.f32 %v1690, %v1711
    %v1730 = vadd.f32 %v1691, %v1711
    %v1731 = vadd.f32 %v1692, %v1711
    %v1732 = vadd.f32 %v1693, %v1711
    %v1733 = vadd.f32 %v1694, %v1711
    %v1734 = vadd.f32 %v1695, %v1711
    %v1735 = vadd.f32 %v1696, %v1711
    %v1736 = vadd.f32 %v1697, %v1711
    %v1737 = vadd.f32 %v1698, %v1711
    %v1738 = vadd.f32 %v1699, %v1711
    %v1739 = vadd.f32 %v1700, %v1711
    %v1740 = vadd.f32 %v1701, %v1711
    %v1741 = vadd.f32 %v1702, %v1711
    %v1742 = vadd.f32 %v1703, %v1711
    %v1743 = vadd.f32 %v1704, %v1711
    %v1744 = vadd.f32 %v1705, %v1711
    %v1745 = vmax.f32 %v1713, 0.0
    %v1746 = vmax.f32 %v1714, 0.0
    %v1747 = vmax.f32 %v1715, 0.0
    %v1748 = vmax.f32 %v1716, 0.0
    %v1749 = vmax.f32 %v1717, 0.0
    %v1750 = vmax.f32 %v1718, 0.0
    %v1751 = vmax.f32 %v1719, 0.0
    %v1752 = vmax.f32 %v1720, 0.0
    %v1753 = vmax.f32 %v1721, 0.0
    %v1754 = vmax.f32 %v1722, 0.0
    %v1755 = vmax.f32 %v1723, 0.0
    %v1756 = vmax.f32 %v1724, 0.0
    %v1757 = vmax.f32 %v1725, 0.0
    %v1758 = vmax.f32 %v1726, 0.0
    %v1759 = vmax.f32 %v1727, 0.0
    %v1760 = vmax.f32 %v1728, 0.0
    %v1761 = vmax.f32 %v1729, 0.0
    %v1762 = vmax.f32 %v1730, 0.0
    %v1763 = vmax.f32 %v1731, 0.0
    %v1764 = vmax.f32 %v1732, 0.0
    %v1765 = vmax.f32 %v1733, 0.0
    %v1766 = vmax.f32 %v1734, 0.0
    %v1767 = vmax.f32 %v1735, 0.0
    %v1768 = vmax.f32 %v1736, 0.0
    %v1769 = vmax.f32 %v1737, 0.0
    %v1770 = vmax.f32 %v1738, 0.0
    %v1771 = vmax.f32 %v1739, 0.0
    %v1772 = vmax.f32 %v1740, 0.0
    %v1773 = vmax.f32 %v1741, 0.0
    %v1774 = vmax.f32 %v1742, 0.0
    %v1775 = vmax.f32 %v1743, 0.0
    %v1776 = vmax.f32 %v1744, 0.0
    %v1777 = vld [vmem:[#allocation7] sm:$0xff]
    %v1778 = vld [vmem:[#allocation7 + $0x8] sm:$0xff]
    %v1779 = vmul.f32 %v1745, %v1777
    %v1780 = vmul.f32 %v1746, %v1778
    %v1781 = vmul.f32 %v1747, %v1777
    %v1782 = vmul.f32 %v1748, %v1778
    %v1783 = vmul.f32 %v1749, %v1777
    %v1784 = vmul.f32 %v1750, %v1778
    %v1785 = vmul.f32 %v1751, %v1777
    %v1786 = vmul.f32 %v1752, %v1778
    %v1787 = vmul.f32 %v1753, %v1777
    %v1788 = vmul.f32 %v1754, %v1778
    %v1789 = vmul.f32 %v1755, %v1777
    %v1790 = vmul.f32 %v1756, %v1778
    %v1791 = vmul.f32 %v1757, %v1777
    %v1792 = vmul.f32 %v1758, %v1778
    %v1793 = vmul.f32 %v1759, %v1777
    %v1794 = vmul.f32 %v1760, %v1778
    %v1795 = vmul.f32 %v1761, %v1777
    %v1796 = vmul.f32 %v1762, %v1778
    %v1797 = vmul.f32 %v1763, %v1777
    %v1798 = vmul.f32 %v1764, %v1778
    %v1799 = vmul.f32 %v1765, %v1777
    %v1800 = vmul.f32 %v1766, %v1778
    %v1801 = vmul.f32 %v1767, %v1777
    %v1802 = vmul.f32 %v1768, %v1778
    %v1803 = vmul.f32 %v1769, %v1777
    %v1804 = vmul.f32 %v1770, %v1778
    %v1805 = vmul.f32 %v1771, %v1777
    %v1806 = vmul.f32 %v1772, %v1778
    %v1807 = vmul.f32 %v1773, %v1777
    %v1808 = vmul.f32 %v1774, %v1778
    %v1809 = vmul.f32 %v1775, %v1777
    %v1810 = vmul.f32 %v1776, %v1778
    %v1811 = vmax.f32 %v1779, %v1780
    %v1812 = vrot.slane %v1811, 4
    %v1813 = vmax.f32 %v1811, %v1812
    %v1814 = vrot.slane %v1813, 2
    %v1815 = vmax.f32 %v1813, %v1814
    %v1816 = vrot.slane %v1815, 1
    %v1817 = vmax.f32 %v1815, %v1816
    %v1818 = vmax.f32 %v1781, %v1782
    %v1819 = vrot.slane %v1818, 4
    %v1820 = vmax.f32 %v1818, %v1819
    %v1821 = vrot.slane %v1820, 2
    %v1822 = vmax.f32 %v1820, %v1821
    %v1823 = vrot.slane %v1822, 1
    %v1824 = vmax.f32 %v1822, %v1823
    %v1825 = vmax.f32 %v1783, %v1784
    %v1826 = vrot.slane %v1825, 4
    %v1827 = vmax.f32 %v1825, %v1826
    %v1828 = vrot.slane %v1827, 2
    %v1829 = vmax.f32 %v1827, %v1828
    %v1830 = vrot.slane %v1829, 1
    %v1831 = vmax.f32 %v1829, %v1830
    %v1832 = vmax.f32 %v1785, %v1786
    %v1833 = vrot.slane %v1832, 4
    %v1834 = vmax.f32 %v1832, %v1833
    %v1835 = vrot.slane %v1834, 2
    %v1836 = vmax.f32 %v1834, %v1835
    %v1837 = vrot.slane %v1836, 1
    %v1838 = vmax.f32 %v1836, %v1837
    %v1839 = vmax.f32 %v1787, %v1788
    %v1840 = vrot.slane %v1839, 4
    %v1841 = vmax.f32 %v1839, %v1840
    %v1842 = vrot.slane %v1841, 2
    %v1843 = vmax.f32 %v1841, %v1842
    %v1844 = vrot.slane %v1843, 1
    %v1845 = vmax.f32 %v1843, %v1844
    %v1846 = vmax.f32 %v1789, %v1790
    %v1847 = vrot.slane %v1846, 4
    %v1848 = vmax.f32 %v1846, %v1847
    %v1849 = vrot.slane %v1848, 2
    %v1850 = vmax.f32 %v1848, %v1849
    %v1851 = vrot.slane %v1850, 1
    %v1852 = vmax.f32 %v1850, %v1851
    %v1853 = vmax.f32 %v1791, %v1792
    %v1854 = vrot.slane %v1853, 4
    %v1855 = vmax.f32 %v1853, %v1854
    %v1856 = vrot.slane %v1855, 2
    %v1857 = vmax.f32 %v1855, %v1856
    %v1858 = vrot.slane %v1857, 1
    %v1859 = vmax.f32 %v1857, %v1858
    %v1860 = vmax.f32 %v1793, %v1794
    %v1861 = vrot.slane %v1860, 4
    %v1862 = vmax.f32 %v1860, %v1861
    %v1863 = vrot.slane %v1862, 2
    %v1864 = vmax.f32 %v1862, %v1863
    %v1865 = vrot.slane %v1864, 1
    %v1866 = vmax.f32 %v1864, %v1865
    %v1867 = vmax.f32 %v1795, %v1796
    %v1868 = vrot.slane %v1867, 4
    %v1869 = vmax.f32 %v1867, %v1868
    %v1870 = vrot.slane %v1869, 2
    %v1871 = vmax.f32 %v1869, %v1870
    %v1872 = vrot.slane %v1871, 1
    %v1873 = vmax.f32 %v1871, %v1872
    %v1874 = vmax.f32 %v1797, %v1798
    %v1875 = vrot.slane %v1874, 4
    %v1876 = vmax.f32 %v1874, %v1875
    %v1877 = vrot.slane %v1876, 2
    %v1878 = vmax.f32 %v1876, %v1877
    %v1879 = vrot.slane %v1878, 1
    %v1880 = vmax.f32 %v1878, %v1879
    %v1881 = vmax.f32 %v1799, %v1800
    %v1882 = vrot.slane %v1881, 4
    %v1883 = vmax.f32 %v1881, %v1882
    %v1884 = vrot.slane %v1883, 2
    %v1885 = vmax.f32 %v1883, %v1884
    %v1886 = vrot.slane %v1885, 1
    %v1887 = vmax.f32 %v1885, %v1886
    %v1888 = vmax.f32 %v1801, %v1802
    %v1889 = vrot.slane %v1888, 4
    %v1890 = vmax.f32 %v1888, %v1889
    %v1891 = vrot.slane %v1890, 2
    %v1892 = vmax.f32 %v1890, %v1891
    %v1893 = vrot.slane %v1892, 1
    %v1894 = vmax.f32 %v1892, %v1893
    %v1895 = vmax.f32 %v1803, %v1804
    %v1896 = vrot.slane %v1895, 4
    %v1897 = vmax.f32 %v1895, %v1896
    %v1898 = vrot.slane %v1897, 2
    %v1899 = vmax.f32 %v1897, %v1898
    %v1900 = vrot.slane %v1899, 1
    %v1901 = vmax.f32 %v1899, %v1900
    %v1902 = vmax.f32 %v1805, %v1806
    %v1903 = vrot.slane %v1902, 4
    %v1904 = vmax.f32 %v1902, %v1903
    %v1905 = vrot.slane %v1904, 2
    %v1906 = vmax.f32 %v1904, %v1905
    %v1907 = vrot.slane %v1906, 1
    %v1908 = vmax.f32 %v1906, %v1907
    %v1909 = vmax.f32 %v1807, %v1808
    %v1910 = vrot.slane %v1909, 4
    %v1911 = vmax.f32 %v1909, %v1910
    %v1912 = vrot.slane %v1911, 2
    %v1913 = vmax.f32 %v1911, %v1912
    %v1914 = vrot.slane %v1913, 1
    %v1915 = vmax.f32 %v1913, %v1914
    %v1916 = vmax.f32 %v1809, %v1810
    %v1917 = vrot.slane %v1916, 4
    %v1918 = vmax.f32 %v1916, %v1917
    %v1919 = vrot.slane %v1918, 2
    %v1920 = vmax.f32 %v1918, %v1919
    %v1921 = vrot.slane %v1920, 1
    %v1922 = vmax.f32 %v1920, %v1921
    %v1923 = vld [vmem:[#allocation8] sm:$0xff]
    %v1924 = vld [vmem:[#allocation8 + $0x8] sm:$0xff]
    %v1925 = vld [vmem:[#allocation8 + $0x10] sm:$0xff]
    %v1926 = vld [vmem:[#allocation8 + $0x18] sm:$0xff]
    %v1927 = vld [vmem:[#allocation8 + $0x20] sm:$0xff]
    %v1928 = vld [vmem:[#allocation8 + $0x28] sm:$0xff]
    %v1929 = vld [vmem:[#allocation8 + $0x30] sm:$0xff]
    %v1930 = vld [vmem:[#allocation8 + $0x38] sm:$0xff]
    %v1931 = vld [vmem:[#allocation8 + $0x40] sm:$0xff]
    %v1932 = vld [vmem:[#allocation8 + $0x48] sm:$0xff]
    %v1933 = vld [vmem:[#allocation8 + $0x50] sm:$0xff]
    %v1934 = vld [vmem:[#allocation8 + $0x58] sm:$0xff]
    %v1935 = vld [vmem:[#allocation8 + $0x60] sm:$0xff]
    %v1936 = vld [vmem:[#allocation8 + $0x68] sm:$0xff]
    %v1937 = vld [vmem:[#allocation8 + $0x70] sm:$0xff]
    %v1938 = vld [vmem:[#allocation8 + $0x78] sm:$0xff]
    %v1939 = vld [vmem:[%s5] sm:$0x1]
    %v1941 = vlaneseq
    %v1942 = vshrl.u32 %v1941, 7
    %v1943 = vsub.s32 0, %v1942
    %v1944 = vrot.slane %v1939, %v1943
    %vm1962 = vcmask 1041409
    %v1963 = vsel %vm1962, %v1824, %v1817
    %vm1964 = vcmask 1042434
    %v1965 = vsel %vm1964, %v1831, %v1963
    %vm1966 = vcmask 1043459
    %v1967 = vsel %vm1966, %v1838, %v1965
    %vm1968 = vcmask 1044484
    %v1969 = vsel %vm1968, %v1845, %v1967
    %vm1970 = vcmask 1045509
    %v1971 = vsel %vm1970, %v1852, %v1969
    %vm1972 = vcmask 1046534
    %v1973 = vsel %vm1972, %v1859, %v1971
    %vm1974 = vcmask 1047559
    %v1975 = vsel %vm1974, %v1866, %v1973
    %v1976 = vsel %vm1962, %v1880, %v1873
    %v1977 = vsel %vm1964, %v1887, %v1976
    %v1978 = vsel %vm1966, %v1894, %v1977
    %v1979 = vsel %vm1968, %v1901, %v1978
    %v1980 = vsel %vm1970, %v1908, %v1979
    %v1981 = vsel %vm1972, %v1915, %v1980
    %v1982 = vsel %vm1974, %v1922, %v1981
    %1985 = vmatprep.subr.mxu0 0.0
    %1986 = vmatpush1.msra.mxu0 %v1938
    %1987 = vmatprep.subr.mxu0 0.0
    %1988 = vmatpush1.msra.mxu0 %v1937
    %1989 = vmatprep.subr.mxu0 0.0
    %1990 = vmatpush1.msra.mxu0 %v1936
    %1991 = vmatprep.subr.mxu0 0.0
    %1992 = vmatpush1.msra.mxu0 %v1935
    %1993 = vmatprep.subr.mxu0 0.0
    %1994 = vmatpush1.msra.mxu0 %v1934
    %1995 = vmatprep.subr.mxu0 0.0
    %1996 = vmatpush1.msra.mxu0 %v1933
    %1997 = vmatprep.subr.mxu0 0.0
    %1998 = vmatpush1.msra.mxu0 %v1932
    %1999 = vmatprep.subr.mxu0 0.0
    %2000 = vmatpush1.msra.mxu0 %v1931
    %2001 = vmatprep.subr.mxu0 0.0
    %2002 = vmatpush1.msra.mxu0 %v1930
    %2003 = vmatprep.subr.mxu0 0.0
    %2004 = vmatpush1.msra.mxu0 %v1929
    %2005 = vmatprep.subr.mxu0 0.0
    %2006 = vmatpush1.msra.mxu0 %v1928
    %2007 = vmatprep.subr.mxu0 0.0
    %2008 = vmatpush1.msra.mxu0 %v1927
    %2009 = vmatprep.subr.mxu0 0.0
    %2010 = vmatpush1.msra.mxu0 %v1926
    %2011 = vmatprep.subr.mxu0 0.0
    %2012 = vmatpush1.msra.mxu0 %v1925
    %2013 = vmatprep.subr.mxu0 0.0
    %2014 = vmatpush1.msra.mxu0 %v1924
    %2015 = vmatprep.subr.mxu0 0.0
    %2016 = vmatpush1.msra.mxu0 %v1923
    %2017 = vmatprep.subr.mxu0 0.0
    %2018 = vmatpush2.msra.mxu0 0.0
    %2019 = vmatprep.subr.mxu0 0.0
    %2020 = vmatpush2.msra.mxu0 0.0
    %2021 = vmatprep.subr.mxu0 0.0
    %2022 = vmatpush2.msra.mxu0 0.0
    %2023 = vmatprep.subr.mxu0 0.0
    %2024 = vmatpush2.msra.mxu0 0.0
    %2025 = vmatprep.subr.mxu0 0.0
    %2026 = vmatpush2.msra.mxu0 0.0
    %2027 = vmatprep.subr.mxu0 0.0
    %2028 = vmatpush2.msra.mxu0 0.0
    %2029 = vmatprep.subr.mxu0 0.0
    %2030 = vmatpush2.msra.mxu0 0.0
    %2031 = vmatprep.subr.mxu0 0.0
    %2032 = vmatpush2.msra.mxu0 0.0
    %2033 = vmatprep.subr.mxu0 0.0
    %2034 = vmatpush2.msra.mxu0 0.0
    %2035 = vmatprep.subr.mxu0 0.0
    %2036 = vmatpush2.msra.mxu0 0.0
    %2037 = vmatprep.subr.mxu0 0.0
    %2038 = vmatpush2.msra.mxu0 0.0
    %2039 = vmatprep.subr.mxu0 0.0
    %2040 = vmatpush2.msra.mxu0 0.0
    %2041 = vmatprep.subr.mxu0 0.0
    %2042 = vmatpush2.msra.mxu0 0.0
    %2043 = vmatprep.subr.mxu0 0.0
    %2044 = vmatpush2.msra.mxu0 0.0
    %2045 = vmatprep.subr.mxu0 0.0
    %2046 = vmatpush2.msra.mxu0 0.0
    %2047 = vmatprep.subr.mxu0 0.0
    %2048 = vmatpush2.msra.mxu0 0.0
    %2049 = vmatprep.mubr.f32.mxu0 0.0
    %2050 = vmatmul.mubr.f32.gmra.mxu0 %v1975
    %v2051 = vpop.f32.mrf.mxu0
    %v2052 = vadd.f32 %v1944, %v2051
    %v2053 = vpop.f32.mrf.mxu0
    %2054 = vmatprep.mubr.f32.mxu0 0.0
    %2055 = vmatmul.mubr.f32.gmra.mxu0 %v1982
    %v2056 = vpop.f32.mrf.mxu0
    %v2057 = vadd.f32 %v1944, %v2056
    %v2058 = vpop.f32.mrf.mxu0
    %2059 = vdwg.mxu0
    %2060 = vst [vmem:[#allocation10] sm:$0xff] %v2052
    %2061 = vst [vmem:[#allocation10 + $0x8] sm:$0xff] %v2057
    // Predicated region
    $region42: #{tpu_custom_call.1} parent=1 // pred_check
      _
    $region43: #{tpu_custom_call.1} parent=1 // pred_check_branch
      %2063 = sbr.rel (0) target = $region45
    $region44: #{tpu_custom_call.1} parent=1 // pred_region
      %s2065 = ssub.s32 256, 256
      %2066 = vsyncadd [#allocation4], %s2065
      %s2067 = sshll.u32 [#allocation10], 4
      %s2068 = int_to_ptr.vmem [resolvable:$true] %s2067
      %2073 = dma.vmem_to_hbm [thread:$0]  %s2068, 256, %s6, [#allocation4], 128, 128, 8
    $region45: #{tpu_custom_call.1} parent=1 // pred_fallthru
      _
    // Predicated region
    $region46: #{tpu_custom_call.1} parent=1 // pred_check
      _
    $region47: #{tpu_custom_call.1} parent=1 // pred_check_branch
      %2075 = sbr.rel (0) target = $region49
    $region48: #{tpu_custom_call.1} parent=1 // pred_region
      %2076 = dma.done [#allocation4], 256
    $region49: #{tpu_custom_call.1} parent=1 // pred_fallthru
      _
    %2077 = vsyncpa [#allocation3], 1
    %2078 = vsyncpa [#allocation6], 1
    %2079 = vsyncpa [#allocation9], 1
    %2080 = vsyncpa [#allocation4], 1

</llo_original>
